<compile_context>
chip_gen: v6e
topology: v6e:2x2x1
jax: 0.10.0
libtpu: 0.0.40
codegen_flags: <defaults>
</compile_context>

<pallas_src>
import jax
import jax.numpy as jnp
from jax.experimental import pallas as pl
from jax.experimental.pallas import tpu as pltpu


def dwconv3x3_s2_kernel(x_ref, xh_ref, w_ref, o_ref):
    """One (batch, row-tile) grid step of the depthwise 3x3 stride-2 conv.

    x_ref : (1, 2, 2, TH, Wq, C)  phase-decomposed input rows [r*TH, r*TH+TH)
            x_ref[0, rp, cp, a, b, c] == x_pad[2*(r*TH + a) + rp, 2*b + cp, c]
    xh_ref: (1, 1, 2, 1, Wq, C)   halo: phase-0 row (r+1)*TH (needed only by kh==2 taps)
    w_ref : (3, 3, 1, 1, C)       per-channel 3x3 filters
    o_ref : (1, TH, Wo, C)        output rows [r*TH, r*TH+TH)
    """
    TH, Wo, C = o_ref.shape[1], o_ref.shape[2], o_ref.shape[3]

    # Hoist: single load of all 9 per-channel filter taps.
    w = w_ref[...]                                  # (3, 3, 1, 1, C)

    # Shifted phase-0 plane (rows i+1) for the kh==2 taps: rows 1..TH-1 come from the
    # main block, row TH comes from the 1-row halo block.
    if TH > 1:
        x0_shift = jnp.concatenate(
            [x_ref[0, 0, :, 1:, :, :], xh_ref[0, 0, :, :, :, :]], axis=1)   # (2, TH, Wq, C)
    else:
        x0_shift = xh_ref[0, 0, :, :, :, :]                                  # (2, 1, Wq, C)

    acc = jnp.zeros((TH, Wo, C), jnp.float32)
    # out[i, j, c] = sum_{kh, kw} x_pad[2i+kh, 2j+kw, c] * w[kh, kw, c]
    #             = sum_{kh, kw} x_ph[kh%2, kw%2, i + kh//2, j + kw//2, c] * w[kh, kw, c]
    for kh in range(3):
        rp = kh % 2
        for kw in range(3):
            cp, dc = kw % 2, kw // 2
            wv = w[kh, kw, 0].astype(jnp.float32)                 # (1, C) broadcast
            if kh < 2:
                tap = x_ref[0, rp, cp, :, dc:dc + Wo, :]           # rows a = i      -> (TH, Wo, C)
            else:
                tap = x0_shift[cp, :, dc:dc + Wo, :]               # rows a = i + 1  -> (TH, Wo, C)
            acc = acc + tap.astype(jnp.float32) * wv
    o_ref[0] = acc.astype(o_ref.dtype)


def depthwise_conv3x3_s2(x_nchw, w_oihw, *, row_tile=8):
    """x_nchw: (N, C, H, W), w_oihw: (C, 1, 3, 3).  Returns (N, C, Ho, Wo)."""
    N, C, H, W = x_nchw.shape
    Ho = (H - 1) // 2 + 1
    Wo = (W - 1) // 2 + 1
    Hq, Wq = Ho + 1, Wo + 1

    # Output-row tile size (must divide Ho).
    TH = min(row_tile, Ho)
    while Ho % TH:
        TH -= 1

    # Zero-pad (1 on top/left; bottom/right up to the 2*Hq x 2*Wq phase grid — the extra
    # zero rows/cols are never multiplied into valid outputs except as legitimate padding).
    x_pad = jnp.pad(x_nchw, ((0, 0), (0, 0), (1, 2 * Hq - H - 1), (1, 2 * Wq - W - 1)))
    # Stride-phase decomposition built directly from NCHW:
    #   x_ph[n, rp, cp, a, b, c] == x_pad[n, c, 2a+rp, 2b+cp]
    x_ph = x_pad.reshape(N, C, Hq, 2, Wq, 2).transpose(0, 3, 5, 2, 4, 1)   # (N,2,2,Hq,Wq,C)
    # (C, 1, 3, 3) -> (3, 3, 1, 1, C) for channels-last broadcast inside the kernel.
    w_k = jnp.transpose(w_oihw[:, 0], (1, 2, 0)).reshape(3, 3, 1, 1, C)

    out_nhwc = pl.pallas_call(
        dwconv3x3_s2_kernel,
        out_shape=jax.ShapeDtypeStruct((N, Ho, Wo, C), x_nchw.dtype),
        grid=(N, Ho // TH),
        in_specs=[
            # Main tile: both row phases, rows [r*TH, r*TH + TH).
            pl.BlockSpec((1, 2, 2, TH, Wq, C), lambda n, r: (n, 0, 0, r, 0, 0)),
            # Halo: phase-0 row (r+1)*TH (block size 1 along the row axis -> exact row).
            pl.BlockSpec((1, 1, 2, 1, Wq, C), lambda n, r: (n, 0, 0, (r + 1) * TH, 0, 0)),
            # Full weight block every step (tiny).
            pl.BlockSpec((3, 3, 1, 1, C), lambda n, r: (0, 0, 0, 0, 0)),
        ],
        out_specs=pl.BlockSpec((1, TH, Wo, C), lambda n, r: (n, r, 0, 0)),
        compiler_params=pltpu.CompilerParams(
            dimension_semantics=("parallel", "parallel")),
    )(x_ph, x_ph, w_k)

    return jnp.transpose(out_nhwc, (0, 3, 1, 2))   # back to NCHW


if __name__ == "__main__":
    key = jax.random.PRNGKey(0)
    kx, kw = jax.random.split(key)

    # Module shape is (1, 192, 112, 112); keep C=192 but use a small spatial size that
    # still exercises multiple row tiles (Ho=16 -> 2 tiles of 8) and the batch grid axis.
    N, C, H, W = 2, 192, 32, 32
    x = jax.random.normal(kx, (N, C, H, W), dtype=jnp.float32)
    w = jax.random.normal(kw, (C, 1, 3, 3), dtype=jnp.float32) * 0.1  # depthwise weights

    conv = jax.jit(depthwise_conv3x3_s2)
    out = jax.block_until_ready(conv(x, w))

    # Reference: XLA grouped convolution (same semantics as torch depthwise conv).
    ref = jax.lax.conv_general_dilated(
        x, w, window_strides=(2, 2), padding=((1, 1), (1, 1)),
        dimension_numbers=("NCHW", "OIHW", "NCHW"), feature_group_count=C)
    ref = jax.block_until_ready(ref)

    assert out.shape == (N, C, H // 2, W // 2), out.shape
    max_err = float(jnp.max(jnp.abs(out - ref)))
    assert jnp.allclose(out, ref, rtol=1e-4, atol=1e-4), max_err
    print("KERNEL_OK")
</pallas_src>

<mosaic_0001>
module attributes {stable_mosaic.version = 11 : i64} {
  func.func @dwconv3x3_s2_kernel(%arg0: i32, %arg1: i32, %arg2: memref<1x2x2x8x17x192xf32, #tpu.memory_space<vmem>>, %arg3: memref<1x1x2x1x17x192xf32, #tpu.memory_space<vmem>>, %arg4: memref<3x3x1x1x192xf32, #tpu.memory_space<vmem>>, %arg5: memref<1x8x16x192xf32, #tpu.memory_space<vmem>>) attributes {dimension_semantics = [#tpu.dimension_semantics<parallel>, #tpu.dimension_semantics<parallel>], iteration_bounds = array<i64: 2, 2>, scalar_prefetch = 0 : i64, scratch_operands = 0 : i64, tpu.core_type = #tpu.core_type<tc>, window_params = [{transform_indices = @transform_0, window_bounds = array<i64: 1, 2, 2, 8, 17, 192>}, {transform_indices = @transform_1, window_bounds = array<i64: 1, 1, 2, 1, 17, 192>}, {pipeline_mode = #tpu.pipeline_mode<synchronous>, transform_indices = @transform_2, window_bounds = array<i64: 3, 3, 1, 1, 192>}, {transform_indices = @transform_3, window_bounds = array<i64: 1, 8, 16, 192>}]} {
    %c0 = arith.constant 0 : index
    %c0_0 = arith.constant 0 : index
    %c0_1 = arith.constant 0 : index
    %c0_2 = arith.constant 0 : index
    %c0_3 = arith.constant 0 : index
    %0 = vector.load %arg4[%c0, %c0_0, %c0_1, %c0_2, %c0_3] : memref<3x3x1x1x192xf32, #tpu.memory_space<vmem>>, vector<3x3x1x1x192xf32>
    %c0_4 = arith.constant 0 : index
    %c0_5 = arith.constant 0 : index
    %c0_6 = arith.constant 0 : index
    %c1 = arith.constant 1 : index
    %c0_7 = arith.constant 0 : index
    %c0_8 = arith.constant 0 : index
    %1 = vector.load %arg2[%c0_4, %c0_5, %c0_6, %c1, %c0_7, %c0_8] : memref<1x2x2x8x17x192xf32, #tpu.memory_space<vmem>>, vector<1x1x2x7x17x192xf32>
    %2 = vector.shape_cast %1 : vector<1x1x2x7x17x192xf32> to vector<2x7x17x192xf32>
    %c0_9 = arith.constant 0 : index
    %c0_10 = arith.constant 0 : index
    %c0_11 = arith.constant 0 : index
    %c0_12 = arith.constant 0 : index
    %c0_13 = arith.constant 0 : index
    %c0_14 = arith.constant 0 : index
    %3 = vector.load %arg3[%c0_9, %c0_10, %c0_11, %c0_12, %c0_13, %c0_14] : memref<1x1x2x1x17x192xf32, #tpu.memory_space<vmem>>, vector<1x1x2x1x17x192xf32>
    %4 = vector.shape_cast %3 : vector<1x1x2x1x17x192xf32> to vector<2x1x17x192xf32>
    %5 = tpu.concatenate %2, %4 in 1 : vector<2x7x17x192xf32>, vector<2x1x17x192xf32> -> vector<2x8x17x192xf32>
    %cst = arith.constant 0.000000e+00 : f32
    %6 = vector.broadcast %cst : f32 to vector<8x16x192xf32>
    %7 = vector.extract_strided_slice %0 {offsets = [0, 0, 0, 0, 0], sizes = [1, 1, 1, 1, 192], strides = [1, 1, 1, 1, 1]} : vector<3x3x1x1x192xf32> to vector<1x1x1x1x192xf32>
    %8 = vector.shape_cast %7 : vector<1x1x1x1x192xf32> to vector<1x192xf32>
    %c0_15 = arith.constant 0 : index
    %c0_16 = arith.constant 0 : index
    %c0_17 = arith.constant 0 : index
    %c0_18 = arith.constant 0 : index
    %c0_19 = arith.constant 0 : index
    %c0_20 = arith.constant 0 : index
    %9 = vector.load %arg2[%c0_15, %c0_16, %c0_17, %c0_18, %c0_19, %c0_20] : memref<1x2x2x8x17x192xf32, #tpu.memory_space<vmem>>, vector<1x1x1x8x16x192xf32>
    %10 = vector.shape_cast %9 : vector<1x1x1x8x16x192xf32> to vector<8x16x192xf32>
    %11 = vector.shape_cast %8 : vector<1x192xf32> to vector<1x1x192xf32>
    %12 = vector.broadcast %11 : vector<1x1x192xf32> to vector<8x16x192xf32>
    %13 = arith.mulf %10, %12 : vector<8x16x192xf32>
    %14 = arith.addf %6, %13 : vector<8x16x192xf32>
    %15 = vector.extract_strided_slice %0 {offsets = [0, 1, 0, 0, 0], sizes = [1, 1, 1, 1, 192], strides = [1, 1, 1, 1, 1]} : vector<3x3x1x1x192xf32> to vector<1x1x1x1x192xf32>
    %16 = vector.shape_cast %15 : vector<1x1x1x1x192xf32> to vector<1x192xf32>
    %c0_21 = arith.constant 0 : index
    %c0_22 = arith.constant 0 : index
    %c1_23 = arith.constant 1 : index
    %c0_24 = arith.constant 0 : index
    %c0_25 = arith.constant 0 : index
    %c0_26 = arith.constant 0 : index
    %17 = vector.load %arg2[%c0_21, %c0_22, %c1_23, %c0_24, %c0_25, %c0_26] : memref<1x2x2x8x17x192xf32, #tpu.memory_space<vmem>>, vector<1x1x1x8x16x192xf32>
    %18 = vector.shape_cast %17 : vector<1x1x1x8x16x192xf32> to vector<8x16x192xf32>
    %19 = vector.shape_cast %16 : vector<1x192xf32> to vector<1x1x192xf32>
    %20 = vector.broadcast %19 : vector<1x1x192xf32> to vector<8x16x192xf32>
    %21 = arith.mulf %18, %20 : vector<8x16x192xf32>
    %22 = arith.addf %14, %21 : vector<8x16x192xf32>
    %23 = vector.extract_strided_slice %0 {offsets = [0, 2, 0, 0, 0], sizes = [1, 1, 1, 1, 192], strides = [1, 1, 1, 1, 1]} : vector<3x3x1x1x192xf32> to vector<1x1x1x1x192xf32>
    %24 = vector.shape_cast %23 : vector<1x1x1x1x192xf32> to vector<1x192xf32>
    %c0_27 = arith.constant 0 : index
    %c0_28 = arith.constant 0 : index
    %c0_29 = arith.constant 0 : index
    %c0_30 = arith.constant 0 : index
    %c1_31 = arith.constant 1 : index
    %c0_32 = arith.constant 0 : index
    %25 = vector.load %arg2[%c0_27, %c0_28, %c0_29, %c0_30, %c1_31, %c0_32] : memref<1x2x2x8x17x192xf32, #tpu.memory_space<vmem>>, vector<1x1x1x8x16x192xf32>
    %26 = vector.shape_cast %25 : vector<1x1x1x8x16x192xf32> to vector<8x16x192xf32>
    %27 = vector.shape_cast %24 : vector<1x192xf32> to vector<1x1x192xf32>
    %28 = vector.broadcast %27 : vector<1x1x192xf32> to vector<8x16x192xf32>
    %29 = arith.mulf %26, %28 : vector<8x16x192xf32>
    %30 = arith.addf %22, %29 : vector<8x16x192xf32>
    %31 = vector.extract_strided_slice %0 {offsets = [1, 0, 0, 0, 0], sizes = [1, 1, 1, 1, 192], strides = [1, 1, 1, 1, 1]} : vector<3x3x1x1x192xf32> to vector<1x1x1x1x192xf32>
    %32 = vector.shape_cast %31 : vector<1x1x1x1x192xf32> to vector<1x192xf32>
    %c0_33 = arith.constant 0 : index
    %c1_34 = arith.constant 1 : index
    %c0_35 = arith.constant 0 : index
    %c0_36 = arith.constant 0 : index
    %c0_37 = arith.constant 0 : index
    %c0_38 = arith.constant 0 : index
    %33 = vector.load %arg2[%c0_33, %c1_34, %c0_35, %c0_36, %c0_37, %c0_38] : memref<1x2x2x8x17x192xf32, #tpu.memory_space<vmem>>, vector<1x1x1x8x16x192xf32>
    %34 = vector.shape_cast %33 : vector<1x1x1x8x16x192xf32> to vector<8x16x192xf32>
    %35 = vector.shape_cast %32 : vector<1x192xf32> to vector<1x1x192xf32>
    %36 = vector.broadcast %35 : vector<1x1x192xf32> to vector<8x16x192xf32>
    %37 = arith.mulf %34, %36 : vector<8x16x192xf32>
    %38 = arith.addf %30, %37 : vector<8x16x192xf32>
    %39 = vector.extract_strided_slice %0 {offsets = [1, 1, 0, 0, 0], sizes = [1, 1, 1, 1, 192], strides = [1, 1, 1, 1, 1]} : vector<3x3x1x1x192xf32> to vector<1x1x1x1x192xf32>
    %40 = vector.shape_cast %39 : vector<1x1x1x1x192xf32> to vector<1x192xf32>
    %c0_39 = arith.constant 0 : index
    %c1_40 = arith.constant 1 : index
    %c1_41 = arith.constant 1 : index
    %c0_42 = arith.constant 0 : index
    %c0_43 = arith.constant 0 : index
    %c0_44 = arith.constant 0 : index
    %41 = vector.load %arg2[%c0_39, %c1_40, %c1_41, %c0_42, %c0_43, %c0_44] : memref<1x2x2x8x17x192xf32, #tpu.memory_space<vmem>>, vector<1x1x1x8x16x192xf32>
    %42 = vector.shape_cast %41 : vector<1x1x1x8x16x192xf32> to vector<8x16x192xf32>
    %43 = vector.shape_cast %40 : vector<1x192xf32> to vector<1x1x192xf32>
    %44 = vector.broadcast %43 : vector<1x1x192xf32> to vector<8x16x192xf32>
    %45 = arith.mulf %42, %44 : vector<8x16x192xf32>
    %46 = arith.addf %38, %45 : vector<8x16x192xf32>
    %47 = vector.extract_strided_slice %0 {offsets = [1, 2, 0, 0, 0], sizes = [1, 1, 1, 1, 192], strides = [1, 1, 1, 1, 1]} : vector<3x3x1x1x192xf32> to vector<1x1x1x1x192xf32>
    %48 = vector.shape_cast %47 : vector<1x1x1x1x192xf32> to vector<1x192xf32>
    %c0_45 = arith.constant 0 : index
    %c1_46 = arith.constant 1 : index
    %c0_47 = arith.constant 0 : index
    %c0_48 = arith.constant 0 : index
    %c1_49 = arith.constant 1 : index
    %c0_50 = arith.constant 0 : index
    %49 = vector.load %arg2[%c0_45, %c1_46, %c0_47, %c0_48, %c1_49, %c0_50] : memref<1x2x2x8x17x192xf32, #tpu.memory_space<vmem>>, vector<1x1x1x8x16x192xf32>
    %50 = vector.shape_cast %49 : vector<1x1x1x8x16x192xf32> to vector<8x16x192xf32>
    %51 = vector.shape_cast %48 : vector<1x192xf32> to vector<1x1x192xf32>
    %52 = vector.broadcast %51 : vector<1x1x192xf32> to vector<8x16x192xf32>
    %53 = arith.mulf %50, %52 : vector<8x16x192xf32>
    %54 = arith.addf %46, %53 : vector<8x16x192xf32>
    %55 = vector.extract_strided_slice %0 {offsets = [2, 0, 0, 0, 0], sizes = [1, 1, 1, 1, 192], strides = [1, 1, 1, 1, 1]} : vector<3x3x1x1x192xf32> to vector<1x1x1x1x192xf32>
    %56 = vector.shape_cast %55 : vector<1x1x1x1x192xf32> to vector<1x192xf32>
    %57 = vector.extract_strided_slice %5 {offsets = [0, 0, 0, 0], sizes = [1, 8, 16, 192], strides = [1, 1, 1, 1]} : vector<2x8x17x192xf32> to vector<1x8x16x192xf32>
    %58 = vector.shape_cast %57 : vector<1x8x16x192xf32> to vector<8x16x192xf32>
    %59 = vector.shape_cast %56 : vector<1x192xf32> to vector<1x1x192xf32>
    %60 = vector.broadcast %59 : vector<1x1x192xf32> to vector<8x16x192xf32>
    %61 = arith.mulf %58, %60 : vector<8x16x192xf32>
    %62 = arith.addf %54, %61 : vector<8x16x192xf32>
    %63 = vector.extract_strided_slice %0 {offsets = [2, 1, 0, 0, 0], sizes = [1, 1, 1, 1, 192], strides = [1, 1, 1, 1, 1]} : vector<3x3x1x1x192xf32> to vector<1x1x1x1x192xf32>
    %64 = vector.shape_cast %63 : vector<1x1x1x1x192xf32> to vector<1x192xf32>
    %65 = vector.extract_strided_slice %5 {offsets = [1, 0, 0, 0], sizes = [1, 8, 16, 192], strides = [1, 1, 1, 1]} : vector<2x8x17x192xf32> to vector<1x8x16x192xf32>
    %66 = vector.shape_cast %65 : vector<1x8x16x192xf32> to vector<8x16x192xf32>
    %67 = vector.shape_cast %64 : vector<1x192xf32> to vector<1x1x192xf32>
    %68 = vector.broadcast %67 : vector<1x1x192xf32> to vector<8x16x192xf32>
    %69 = arith.mulf %66, %68 : vector<8x16x192xf32>
    %70 = arith.addf %62, %69 : vector<8x16x192xf32>
    %71 = vector.extract_strided_slice %0 {offsets = [2, 2, 0, 0, 0], sizes = [1, 1, 1, 1, 192], strides = [1, 1, 1, 1, 1]} : vector<3x3x1x1x192xf32> to vector<1x1x1x1x192xf32>
    %72 = vector.shape_cast %71 : vector<1x1x1x1x192xf32> to vector<1x192xf32>
    %73 = vector.extract_strided_slice %5 {offsets = [0, 0, 1, 0], sizes = [1, 8, 16, 192], strides = [1, 1, 1, 1]} : vector<2x8x17x192xf32> to vector<1x8x16x192xf32>
    %74 = vector.shape_cast %73 : vector<1x8x16x192xf32> to vector<8x16x192xf32>
    %75 = vector.shape_cast %72 : vector<1x192xf32> to vector<1x1x192xf32>
    %76 = vector.broadcast %75 : vector<1x1x192xf32> to vector<8x16x192xf32>
    %77 = arith.mulf %74, %76 : vector<8x16x192xf32>
    %78 = arith.addf %70, %77 : vector<8x16x192xf32>
    %c0_51 = arith.constant 0 : index
    %c0_52 = arith.constant 0 : index
    %c0_53 = arith.constant 0 : index
    %c0_54 = arith.constant 0 : index
    %79 = vector.load %arg5[%c0_51, %c0_52, %c0_53, %c0_54] : memref<1x8x16x192xf32, #tpu.memory_space<vmem>>, vector<1x8x16x192xf32>
    %80 = vector.shape_cast %79 : vector<1x8x16x192xf32> to vector<8x16x192xf32>
    %81 = vector.shape_cast %78 : vector<8x16x192xf32> to vector<1x8x16x192xf32>
    tpu.vector_store %arg5[%c0_51, %c0_52, %c0_53, %c0_54], %81 {strides = array<i32>} : memref<1x8x16x192xf32, #tpu.memory_space<vmem>>, vector<1x8x16x192xf32>,
    return
  }
  func.func @transform_0(%arg0: i32, %arg1: i32) -> (i32, i32, i32, i32, i32, i32) {
    %c0_i32 = arith.constant 0 : i32
    %c0_i32_0 = arith.constant 0 : i32
    %c0_i32_1 = arith.constant 0 : i32
    %c0_i32_2 = arith.constant 0 : i32
    %c0_i32_3 = arith.constant 0 : i32
    return %arg0, %c0_i32, %c0_i32_0, %arg1, %c0_i32_1, %c0_i32_2 : i32, i32, i32, i32, i32, i32
  }
  func.func @transform_1(%arg0: i32, %arg1: i32) -> (i32, i32, i32, i32, i32, i32) {
    %c1_i32 = arith.constant 1 : i32
    %0 = arith.addi %arg1, %c1_i32 : i32
    %c8_i32 = arith.constant 8 : i32
    %1 = arith.muli %0, %c8_i32 : i32
    %c0_i32 = arith.constant 0 : i32
    %c0_i32_0 = arith.constant 0 : i32
    %c0_i32_1 = arith.constant 0 : i32
    %c0_i32_2 = arith.constant 0 : i32
    %c0_i32_3 = arith.constant 0 : i32
    return %arg0, %c0_i32, %c0_i32_0, %1, %c0_i32_1, %c0_i32_2 : i32, i32, i32, i32, i32, i32
  }
  func.func @transform_2(%arg0: i32, %arg1: i32) -> (i32, i32, i32, i32, i32) {
    %c0_i32 = arith.constant 0 : i32
    %c0_i32_0 = arith.constant 0 : i32
    %c0_i32_1 = arith.constant 0 : i32
    %c0_i32_2 = arith.constant 0 : i32
    %c0_i32_3 = arith.constant 0 : i32
    %c0_i32_4 = arith.constant 0 : i32
    return %c0_i32, %c0_i32_0, %c0_i32_1, %c0_i32_2, %c0_i32_3 : i32, i32, i32, i32, i32
  }
  func.func @transform_3(%arg0: i32, %arg1: i32) -> (i32, i32, i32, i32) {
    %c0_i32 = arith.constant 0 : i32
    %c0_i32_0 = arith.constant 0 : i32
    %c0_i32_1 = arith.constant 0 : i32
    return %arg0, %arg1, %c0_i32, %c0_i32_0 : i32, i32, i32, i32
  }
}

</mosaic_0001>

<llo_original>
// kernel: depthwise_conv3x3_s2.1
$region0: #{depthwise_conv3x3_s2.1}
  #allocation0 [shape = 'u32[]', space=smem, size = 0x4, offset = 0x4, fixed_abs, tag = 'smem constant byte address 0x4 - core index']
  #allocation1 [shape = 'u32[144,128]{1,0:T(1,128)}', space=vmem, size = 0x12000, scoped, tag = 'internal scratch']
  %s0 = inlined_call_operand.vmem [shape: f32[2,2,2,17,17,192], index: 0, kind: input, shape index: {}, may-alias: {0,1}]
  %s1 = inlined_call_operand.vmem [shape: f32[2,2,2,17,17,192], index: 1, kind: input, shape index: {}, may-alias: {0,1}]
  %s2 = inlined_call_operand.vmem [shape: f32[3,3,1,1,192], index: 2, kind: input, shape index: {}]
  %s3 = inlined_call_operand.hbm [shape: f32[2,16,16,192], index: 3, kind: output, shape index: {}]
  %s4 = sld [smem:[#allocation0]]
  $region98: #{depthwise_conv3x3_s2.1} parent=0
    _
  %s6 = ssub.s32 1, %s4
  %s7 = scalar_select 0, %s6, %s4
  $region1: #{depthwise_conv3x3_s2.1} parent=0
    #allocation2 [shape = 'u8[1572864]{0}', space=vmem, size = 0x180000, scoped, tag = 'input window, operand 0']
    #allocation3 [shape = 'u8[98304]{0}', space=vmem, size = 0x18000, scoped, tag = 'input window, operand 1']
    #allocation4 [shape = 'u8[262144]{0}', space=vmem, size = 0x40000, scoped, tag = 'output window, operand 0']
    #allocation5 [shape = 's32[2]{0}', space=sflag, size = 0x8, scoped, tag = 'scoped memory for depthwise_conv3x3_s2.1']
    %8 = vsyncpa [#allocation5], 0
    %s9 = scalar_lea.sflag [#allocation5], 1
    %10 = vsyncpa %s9, 0
    loop: start=0, step=1, limit=6
    $region2: #{depthwise_conv3x3_s2.1} parent=1 // loop_pre_header
      _
    $region3: #{depthwise_conv3x3_s2.1} parent=1 // loop_header
      %s12 = sphi 0, %s16
      %p13 = scmp.ge.s32.totalorder %s12, 6
      %s19 = sphi 0, %s31
      %s20 = sphi 0, %s27
      %s21 = sphi 0, %s19
      %s22 = sphi 0, %s20
      %s23 = sphi 0, %s21
      %s24 = sphi 0, %s22
      %s36 = sphi 0, %s38
      %s39 = sphi 0, %s36
      %s40 = sphi 0, %s39
      %s56 = sphi 0, %s40
      %s68 = sphi 0, %s70
      %s71 = sphi 0, %s68
      %s72 = sphi 0, %s71
      %s88 = sphi 0, %s72
      %s92 = sphi 0, %s92
      %s94 = sphi 0, %s92
      %s95 = sphi 0, %s94
      %s109 = sphi 0, %s95
      %s117 = sphi 0, %s119
      %s120 = sphi 0, %s117
      %s121 = sphi 0, %s120
      %s137 = sphi 0, %s121
    $region4: #{depthwise_conv3x3_s2.1} parent=1 // loop_header_branch
      %15 = sbr.rel (%p13) target = $region8
    $region5: #{depthwise_conv3x3_s2.1} parent=1 // loop_body
      %s17 = ssub.s32 %s12, 1
      %s18 = ssub.s32 %s12, 2
      %s25 = sadd.s32 1, %s20
      %p26 = scmp.ge.s32.totalorder %s25, 2
      %s27 = scalar_select %p26, 0, %s25
      %s28 = sadd.s32 1, %s19
      %s29 = scalar_select %p26, %s28, %s19
      %p30 = scmp.ge.s32.totalorder %s29, 2
      %s31 = scalar_select %p30, 0, %s29
      %s32 = ssub.s32 %s19, %s31
      %s33 = ssub.s32 %s20, %s27
      %s34 = sor.u32 %s32, %s33
      %p35 = scmp.eq.s32.totalorder %s34, 0
      %s37 = sadd.s32 %s36, 1
      %s38 = scalar_select %p35, %s36, %s37
      %p41 = pneg %p35
      %p42 = scmp.eq.s32.totalorder %s12, 3
      %p43 = por %p41, %p42
      %p44 = scmp.ne.s32.totalorder %s36, %s39
      %p45 = scmp.eq.s32.totalorder %s12, 0
      %p46 = por %p44, %p45
      %p47 = scmp.ne.s32.totalorder %s36, %s39
      %p48 = scmp.eq.s32.totalorder %s17, 3
      %p49 = por %p47, %p48
      %p50 = scmp.ne.s32.totalorder %s39, %s40
      %p51 = scmp.eq.s32.totalorder %s17, 0
      %p52 = por %p50, %p51
      %p53 = scmp.ne.s32.totalorder %s39, %s40
      %p54 = scmp.eq.s32.totalorder %s18, 3
      %p55 = por %p53, %p54
      %p57 = scmp.ne.s32.totalorder %s40, %s56
      %p58 = scmp.eq.s32.totalorder %s18, 0
      %p59 = por %p57, %p58
      %s60 = sadd.s32 %s20, 1
      %s61 = smul.u32 %s60, 8
      %s62 = sadd.s32 %s27, 1
      %s63 = smul.u32 %s62, 8
      %s64 = ssub.s32 %s19, %s31
      %s65 = ssub.s32 %s61, %s63
      %s66 = sor.u32 %s64, %s65
      %p67 = scmp.eq.s32.totalorder %s66, 0
      %s69 = sadd.s32 %s68, 1
      %s70 = scalar_select %p67, %s68, %s69
      %p73 = pneg %p67
      %p74 = scmp.eq.s32.totalorder %s12, 3
      %p75 = por %p73, %p74
      %p76 = scmp.ne.s32.totalorder %s68, %s71
      %p77 = scmp.eq.s32.totalorder %s12, 0
      %p78 = por %p76, %p77
      %p79 = scmp.ne.s32.totalorder %s68, %s71
      %p80 = scmp.eq.s32.totalorder %s17, 3
      %p81 = por %p79, %p80
      %p82 = scmp.ne.s32.totalorder %s71, %s72
      %p83 = scmp.eq.s32.totalorder %s17, 0
      %p84 = por %p82, %p83
      %p85 = scmp.ne.s32.totalorder %s71, %s72
      %p86 = scmp.eq.s32.totalorder %s18, 3
      %p87 = por %p85, %p86
      %p89 = scmp.ne.s32.totalorder %s72, %s88
      %p90 = scmp.eq.s32.totalorder %s18, 0
      %p91 = por %p89, %p90
      %s93 = sadd.s32 %s92, 1
      %p96 = scmp.eq.s32.totalorder %s12, 3
      %p97 = scmp.ne.s32.totalorder %s92, %s94
      %p98 = scmp.eq.s32.totalorder %s12, 0
      %p99 = por %p97, %p98
      %p100 = scmp.ne.s32.totalorder %s92, %s94
      %p101 = scmp.eq.s32.totalorder %s17, 3
      %p102 = por %p100, %p101
      %p103 = scmp.ne.s32.totalorder %s94, %s95
      %p104 = scmp.eq.s32.totalorder %s17, 0
      %p105 = por %p103, %p104
      %p106 = scmp.ne.s32.totalorder %s94, %s95
      %p107 = scmp.eq.s32.totalorder %s18, 3
      %p108 = por %p106, %p107
      %p110 = scmp.ne.s32.totalorder %s95, %s109
      %p111 = scmp.eq.s32.totalorder %s18, 0
      %p112 = por %p110, %p111
      %s113 = ssub.s32 %s19, %s31
      %s114 = ssub.s32 %s20, %s27
      %s115 = sor.u32 %s113, %s114
      %p116 = scmp.eq.s32.totalorder %s115, 0
      %s118 = sadd.s32 %s117, 1
      %s119 = scalar_select %p116, %s117, %s118
      %p122 = pneg %p116
      %p123 = scmp.eq.s32.totalorder %s12, 3
      %p124 = por %p122, %p123
      %p125 = scmp.ne.s32.totalorder %s117, %s120
      %p126 = scmp.eq.s32.totalorder %s12, 0
      %p127 = por %p125, %p126
      %p128 = scmp.ne.s32.totalorder %s117, %s120
      %p129 = scmp.eq.s32.totalorder %s17, 3
      %p130 = por %p128, %p129
      %p131 = scmp.ne.s32.totalorder %s120, %s121
      %p132 = scmp.eq.s32.totalorder %s17, 0
      %p133 = por %p131, %p132
      %p134 = scmp.ne.s32.totalorder %s120, %s121
      %p135 = scmp.eq.s32.totalorder %s18, 3
      %p136 = por %p134, %p135
      %p138 = scmp.ne.s32.totalorder %s121, %s137
      %p139 = scmp.eq.s32.totalorder %s18, 0
      %p140 = por %p138, %p139
      %p141 = scmp.le.s32.totalorder 1, %s12
      %p142 = scmp.lt.s32.totalorder %s12, 5
      %p143 = pnand %p141, %p142
      %p144 = pneg %p143
      // Predicated region
      $region9: #{depthwise_conv3x3_s2.1} parent=5 // pred_check
        _
      $region10: #{depthwise_conv3x3_s2.1} parent=5 // pred_check_branch
        %146 = sbr.rel (%p143) target = $region12
      $region11: #{depthwise_conv3x3_s2.1} parent=5 // pred_region
        %s147 = ssub.s32 %s12, 1
        // Predicated region
        $region13: #{depthwise_conv3x3_s2.1} parent=11 // pred_check
          %p148 = pneg %p105
        $region14: #{depthwise_conv3x3_s2.1} parent=11 // pred_check_branch
          %150 = sbr.rel (%p148) target = $region16
        $region15: #{depthwise_conv3x3_s2.1} parent=11 // pred_region
          _
        $region16: #{depthwise_conv3x3_s2.1} parent=11 // pred_fallthru
          _
      $region12: #{depthwise_conv3x3_s2.1} parent=5 // pred_fallthru
        _
      %p151 = scmp.lt.s32.totalorder %s12, 4
      // Predicated region
      $region17: #{depthwise_conv3x3_s2.1} parent=5 // pred_check
        %p152 = pneg %p151
      $region18: #{depthwise_conv3x3_s2.1} parent=5 // pred_check_branch
        %154 = sbr.rel (%p152) target = $region20
      $region19: #{depthwise_conv3x3_s2.1} parent=5 // pred_region
        // Predicated region
        $region21: #{depthwise_conv3x3_s2.1} parent=19 // pred_check
          %p155 = pneg %p46
        $region22: #{depthwise_conv3x3_s2.1} parent=19 // pred_check_branch
          %157 = sbr.rel (%p155) target = $region24
        $region23: #{depthwise_conv3x3_s2.1} parent=19 // pred_region
          %s158 = sand.u32 %s36, 1
          %s159 = sand.u32 %s36, 1
          %s160 = smul.addr %s159, 1536
          %s161 = scalar_lea.vmem [#allocation2], %s160
          %s162 = smul.u32 8, %s20
          %s163 = ssub.s32 17, %s162
          %p164 = scmp.lt.s32.totalorder %s163, 8
          %s165 = scalar_select %p164, %s163, 8
          %s166 = smul.u32 512, %s165
          %s167 = smul.u32 %s166, 3
          %s168 = smul.u32 %s167, 2
          %p169 = scmp.ne.s32.totalorder 0, %s168
          %s170 = smul.addr %s162, 6
          %s171 = smul.addr %s19, 408
          %s172 = sadd.s32 %s170, %s171
          %s173 = smul.addr %s172, 8
          %s174 = scalar_lea.vmem %s0, %s173
          %s175 = smul.u32 %s165, 3
          // Predicated region
          $region25: #{depthwise_conv3x3_s2.1} parent=23 // pred_check
            %p176 = pneg %p169
          $region26: #{depthwise_conv3x3_s2.1} parent=23 // pred_check_branch
            %178 = sbr.rel (%p176) target = $region28
          $region27: #{depthwise_conv3x3_s2.1} parent=23 // pred_region
            // Predicated region
            $region29: #{depthwise_conv3x3_s2.1} parent=27 // pred_check
              _
            $region30: #{depthwise_conv3x3_s2.1} parent=27 // pred_check_branch
              %180 = sbr.rel (0) target = $region32
            $region31: #{depthwise_conv3x3_s2.1} parent=27 // pred_region
              %s181 = sshrl.u32 %s175, 3
              // While loop
              $region33: #{depthwise_conv3x3_s2.1} parent=31 // loop_pre_header
                _
              $region34: #{depthwise_conv3x3_s2.1} parent=31 // loop_header
                %s183 = sphi 0, %s185
                %p184 = scmp.ge.s32.totalorder %s183, %s181
                %s188 = sphi 0, %s321
                %s189 = sphi %s174, %s324
                %s190 = sphi %s161, %s325
              $region35: #{depthwise_conv3x3_s2.1} parent=31 // loop_header_branch
                %187 = sbr.rel (%p184) target = $region39
              $region36: #{depthwise_conv3x3_s2.1} parent=31 // loop_body
                %v191 = vld [vmem:[%s189] sm:$0xff]
                %192 = vst [vmem:[%s190] sm:$0xff] %v191
                %v193 = vld [vmem:[%s189 + $0x10] sm:$0xff]
                %194 = vst [vmem:[%s190 + $0x10] sm:$0xff] %v193
                %v195 = vld [vmem:[%s189 + $0x20] sm:$0xff]
                %196 = vst [vmem:[%s190 + $0x20] sm:$0xff] %v195
                %v197 = vld [vmem:[%s189 + $0x30] sm:$0xff]
                %198 = vst [vmem:[%s190 + $0x30] sm:$0xff] %v197
                %v199 = vld [vmem:[%s189 + $0x40] sm:$0xff]
                %200 = vst [vmem:[%s190 + $0x40] sm:$0xff] %v199
                %v201 = vld [vmem:[%s189 + $0x50] sm:$0xff]
                %202 = vst [vmem:[%s190 + $0x50] sm:$0xff] %v201
                %v203 = vld [vmem:[%s189 + $0x60] sm:$0xff]
                %204 = vst [vmem:[%s190 + $0x60] sm:$0xff] %v203
                %v205 = vld [vmem:[%s189 + $0x70] sm:$0xff]
                %206 = vst [vmem:[%s190 + $0x70] sm:$0xff] %v205
                %v207 = vld [vmem:[%s189 + $0x8] sm:$0xff]
                %208 = vst [vmem:[%s190 + $0x8] sm:$0xff] %v207
                %v209 = vld [vmem:[%s189 + $0x18] sm:$0xff]
                %210 = vst [vmem:[%s190 + $0x18] sm:$0xff] %v209
                %v211 = vld [vmem:[%s189 + $0x28] sm:$0xff]
                %212 = vst [vmem:[%s190 + $0x28] sm:$0xff] %v211
                %v213 = vld [vmem:[%s189 + $0x38] sm:$0xff]
                %214 = vst [vmem:[%s190 + $0x38] sm:$0xff] %v213
                %v215 = vld [vmem:[%s189 + $0x48] sm:$0xff]
                %216 = vst [vmem:[%s190 + $0x48] sm:$0xff] %v215
                %v217 = vld [vmem:[%s189 + $0x58] sm:$0xff]
                %218 = vst [vmem:[%s190 + $0x58] sm:$0xff] %v217
                %v219 = vld [vmem:[%s189 + $0x68] sm:$0xff]
                %220 = vst [vmem:[%s190 + $0x68] sm:$0xff] %v219
                %v221 = vld [vmem:[%s189 + $0x78] sm:$0xff]
                %222 = vst [vmem:[%s190 + $0x78] sm:$0xff] %v221
                %v223 = vld [vmem:[%s189 + $0x330] sm:$0xff]
                %224 = vst [vmem:[%s190 + $0x180] sm:$0xff] %v223
                %v225 = vld [vmem:[%s189 + $0x340] sm:$0xff]
                %226 = vst [vmem:[%s190 + $0x190] sm:$0xff] %v225
                %v227 = vld [vmem:[%s189 + $0x350] sm:$0xff]
                %228 = vst [vmem:[%s190 + $0x1a0] sm:$0xff] %v227
                %v229 = vld [vmem:[%s189 + $0x360] sm:$0xff]
                %230 = vst [vmem:[%s190 + $0x1b0] sm:$0xff] %v229
                %v231 = vld [vmem:[%s189 + $0x370] sm:$0xff]
                %232 = vst [vmem:[%s190 + $0x1c0] sm:$0xff] %v231
                %v233 = vld [vmem:[%s189 + $0x380] sm:$0xff]
                %234 = vst [vmem:[%s190 + $0x1d0] sm:$0xff] %v233
                %v235 = vld [vmem:[%s189 + $0x390] sm:$0xff]
                %236 = vst [vmem:[%s190 + $0x1e0] sm:$0xff] %v235
                %v237 = vld [vmem:[%s189 + $0x3a0] sm:$0xff]
                %238 = vst [vmem:[%s190 + $0x1f0] sm:$0xff] %v237
                %v239 = vld [vmem:[%s189 + $0x338] sm:$0xff]
                %240 = vst [vmem:[%s190 + $0x188] sm:$0xff] %v239
                %v241 = vld [vmem:[%s189 + $0x348] sm:$0xff]
                %242 = vst [vmem:[%s190 + $0x198] sm:$0xff] %v241
                %v243 = vld [vmem:[%s189 + $0x358] sm:$0xff]
                %244 = vst [vmem:[%s190 + $0x1a8] sm:$0xff] %v243
                %v245 = vld [vmem:[%s189 + $0x368] sm:$0xff]
                %246 = vst [vmem:[%s190 + $0x1b8] sm:$0xff] %v245
                %v247 = vld [vmem:[%s189 + $0x378] sm:$0xff]
                %248 = vst [vmem:[%s190 + $0x1c8] sm:$0xff] %v247
                %v249 = vld [vmem:[%s189 + $0x388] sm:$0xff]
                %250 = vst [vmem:[%s190 + $0x1d8] sm:$0xff] %v249
                %v251 = vld [vmem:[%s189 + $0x398] sm:$0xff]
                %252 = vst [vmem:[%s190 + $0x1e8] sm:$0xff] %v251
                %v253 = vld [vmem:[%s189 + $0x3a8] sm:$0xff]
                %254 = vst [vmem:[%s190 + $0x1f8] sm:$0xff] %v253
                %v255 = vld [vmem:[%s189 + $0x660] sm:$0xff]
                %256 = vst [vmem:[%s190 + $0x300] sm:$0xff] %v255
                %v257 = vld [vmem:[%s189 + $0x670] sm:$0xff]
                %258 = vst [vmem:[%s190 + $0x310] sm:$0xff] %v257
                %v259 = vld [vmem:[%s189 + $0x680] sm:$0xff]
                %260 = vst [vmem:[%s190 + $0x320] sm:$0xff] %v259
                %v261 = vld [vmem:[%s189 + $0x690] sm:$0xff]
                %262 = vst [vmem:[%s190 + $0x330] sm:$0xff] %v261
                %v263 = vld [vmem:[%s189 + $0x6a0] sm:$0xff]
                %264 = vst [vmem:[%s190 + $0x340] sm:$0xff] %v263
                %v265 = vld [vmem:[%s189 + $0x6b0] sm:$0xff]
                %266 = vst [vmem:[%s190 + $0x350] sm:$0xff] %v265
                %v267 = vld [vmem:[%s189 + $0x6c0] sm:$0xff]
                %268 = vst [vmem:[%s190 + $0x360] sm:$0xff] %v267
                %v269 = vld [vmem:[%s189 + $0x6d0] sm:$0xff]
                %270 = vst [vmem:[%s190 + $0x370] sm:$0xff] %v269
                %v271 = vld [vmem:[%s189 + $0x668] sm:$0xff]
                %272 = vst [vmem:[%s190 + $0x308] sm:$0xff] %v271
                %v273 = vld [vmem:[%s189 + $0x678] sm:$0xff]
                %274 = vst [vmem:[%s190 + $0x318] sm:$0xff] %v273
                %v275 = vld [vmem:[%s189 + $0x688] sm:$0xff]
                %276 = vst [vmem:[%s190 + $0x328] sm:$0xff] %v275
                %v277 = vld [vmem:[%s189 + $0x698] sm:$0xff]
                %278 = vst [vmem:[%s190 + $0x338] sm:$0xff] %v277
                %v279 = vld [vmem:[%s189 + $0x6a8] sm:$0xff]
                %280 = vst [vmem:[%s190 + $0x348] sm:$0xff] %v279
                %v281 = vld [vmem:[%s189 + $0x6b8] sm:$0xff]
                %282 = vst [vmem:[%s190 + $0x358] sm:$0xff] %v281
                %v283 = vld [vmem:[%s189 + $0x6c8] sm:$0xff]
                %284 = vst [vmem:[%s190 + $0x368] sm:$0xff] %v283
                %v285 = vld [vmem:[%s189 + $0x6d8] sm:$0xff]
                %286 = vst [vmem:[%s190 + $0x378] sm:$0xff] %v285
                %v287 = vld [vmem:[%s189 + $0x990] sm:$0xff]
                %288 = vst [vmem:[%s190 + $0x480] sm:$0xff] %v287
                %v289 = vld [vmem:[%s189 + $0x9a0] sm:$0xff]
                %290 = vst [vmem:[%s190 + $0x490] sm:$0xff] %v289
                %v291 = vld [vmem:[%s189 + $0x9b0] sm:$0xff]
                %292 = vst [vmem:[%s190 + $0x4a0] sm:$0xff] %v291
                %v293 = vld [vmem:[%s189 + $0x9c0] sm:$0xff]
                %294 = vst [vmem:[%s190 + $0x4b0] sm:$0xff] %v293
                %v295 = vld [vmem:[%s189 + $0x9d0] sm:$0xff]
                %296 = vst [vmem:[%s190 + $0x4c0] sm:$0xff] %v295
                %v297 = vld [vmem:[%s189 + $0x9e0] sm:$0xff]
                %298 = vst [vmem:[%s190 + $0x4d0] sm:$0xff] %v297
                %v299 = vld [vmem:[%s189 + $0x9f0] sm:$0xff]
                %300 = vst [vmem:[%s190 + $0x4e0] sm:$0xff] %v299
                %v301 = vld [vmem:[%s189 + $0xa00] sm:$0xff]
                %302 = vst [vmem:[%s190 + $0x4f0] sm:$0xff] %v301
                %v303 = vld [vmem:[%s189 + $0x998] sm:$0xff]
                %304 = vst [vmem:[%s190 + $0x488] sm:$0xff] %v303
                %v305 = vld [vmem:[%s189 + $0x9a8] sm:$0xff]
                %306 = vst [vmem:[%s190 + $0x498] sm:$0xff] %v305
                %v307 = vld [vmem:[%s189 + $0x9b8] sm:$0xff]
                %308 = vst [vmem:[%s190 + $0x4a8] sm:$0xff] %v307
                %v309 = vld [vmem:[%s189 + $0x9c8] sm:$0xff]
                %310 = vst [vmem:[%s190 + $0x4b8] sm:$0xff] %v309
                %v311 = vld [vmem:[%s189 + $0x9d8] sm:$0xff]
                %312 = vst [vmem:[%s190 + $0x4c8] sm:$0xff] %v311
                %v313 = vld [vmem:[%s189 + $0x9e8] sm:$0xff]
                %314 = vst [vmem:[%s190 + $0x4d8] sm:$0xff] %v313
                %v315 = vld [vmem:[%s189 + $0x9f8] sm:$0xff]
                %316 = vst [vmem:[%s190 + $0x4e8] sm:$0xff] %v315
                %v317 = vld [vmem:[%s189 + $0xa08] sm:$0xff]
                %318 = vst [vmem:[%s190 + $0x4f8] sm:$0xff] %v317
                %s319 = sadd.s32 1, %s188
                %p320 = scmp.ge.s32.totalorder %s319, %s181
                %s321 = scalar_select %p320, 0, %s319
                %s322 = smul.u32 %s321, 128
                %s323 = smul.u32 %s321, 128
                %s324 = scalar_lea.vmem %s174, %s322
                %s325 = scalar_lea.vmem %s161, %s323 [#allocation2]
              $region37: #{depthwise_conv3x3_s2.1} parent=31 // loop_footer
                %s185 = sadd.s32 %s183, 1
              $region38: #{depthwise_conv3x3_s2.1} parent=31 // loop_footer_branch
                %182 = sbr.rel target = $region34
              $region39: #{depthwise_conv3x3_s2.1} parent=31 // loop_exit
                _
              %s326 = sshrl.u32 %s175, 3
              %s327 = sand.u32 %s175, 7
              %s328 = smul.u32 %s326, 8
              %s329 = smul.u32 16, %s328
              %s330 = scalar_lea.vmem %s174, %s329
              %s331 = smul.u32 16, %s328
              %s332 = scalar_lea.vmem %s161, %s331 [#allocation2]
              // While loop
              $region40: #{depthwise_conv3x3_s2.1} parent=31 // loop_pre_header
                _
              $region41: #{depthwise_conv3x3_s2.1} parent=31 // loop_header
                %s334 = sphi 0, %s336
                %p335 = scmp.ge.s32.totalorder %s334, %s327
                %s339 = sphi 0, %s360
                %s340 = sphi %s330, %s363
                %s341 = sphi %s332, %s364
              $region42: #{depthwise_conv3x3_s2.1} parent=31 // loop_header_branch
                %338 = sbr.rel (%p335) target = $region46
              $region43: #{depthwise_conv3x3_s2.1} parent=31 // loop_body
                %v342 = vld [vmem:[%s340] sm:$0xff]
                %343 = vst [vmem:[%s341] sm:$0xff] %v342
                %v344 = vld [vmem:[%s340 + $0x8] sm:$0xff]
                %345 = vst [vmem:[%s341 + $0x8] sm:$0xff] %v344
                %v346 = vld [vmem:[%s340 + $0x330] sm:$0xff]
                %347 = vst [vmem:[%s341 + $0x180] sm:$0xff] %v346
                %v348 = vld [vmem:[%s340 + $0x338] sm:$0xff]
                %349 = vst [vmem:[%s341 + $0x188] sm:$0xff] %v348
                %v350 = vld [vmem:[%s340 + $0x660] sm:$0xff]
                %351 = vst [vmem:[%s341 + $0x300] sm:$0xff] %v350
                %v352 = vld [vmem:[%s340 + $0x668] sm:$0xff]
                %353 = vst [vmem:[%s341 + $0x308] sm:$0xff] %v352
                %v354 = vld [vmem:[%s340 + $0x990] sm:$0xff]
                %355 = vst [vmem:[%s341 + $0x480] sm:$0xff] %v354
                %v356 = vld [vmem:[%s340 + $0x998] sm:$0xff]
                %357 = vst [vmem:[%s341 + $0x488] sm:$0xff] %v356
                %s358 = sadd.s32 1, %s339
                %p359 = scmp.ge.s32.totalorder %s358, %s327
                %s360 = scalar_select %p359, 0, %s358
                %s361 = smul.u32 %s360, 16
                %s362 = smul.u32 %s360, 16
                %s363 = scalar_lea.vmem %s330, %s361
                %s364 = scalar_lea.vmem %s332, %s362 [#allocation2]
              $region44: #{depthwise_conv3x3_s2.1} parent=31 // loop_footer
                %s336 = sadd.s32 %s334, 1
              $region45: #{depthwise_conv3x3_s2.1} parent=31 // loop_footer_branch
                %333 = sbr.rel target = $region41
              $region46: #{depthwise_conv3x3_s2.1} parent=31 // loop_exit
                _
            $region32: #{depthwise_conv3x3_s2.1} parent=27 // pred_fallthru
              _
            // Predicated region
            $region47: #{depthwise_conv3x3_s2.1} parent=27 // pred_check
              _
            $region48: #{depthwise_conv3x3_s2.1} parent=27 // pred_check_branch
              %366 = sbr.rel target = $region50
            $region49: #{depthwise_conv3x3_s2.1} parent=27 // pred_region
              _
            $region50: #{depthwise_conv3x3_s2.1} parent=27 // pred_fallthru
              _
          $region28: #{depthwise_conv3x3_s2.1} parent=23 // pred_fallthru
            _
          %367 = vnop
        $region24: #{depthwise_conv3x3_s2.1} parent=19 // pred_fallthru
          _
        // Predicated region
        $region51: #{depthwise_conv3x3_s2.1} parent=19 // pred_check
          %p368 = pneg %p78
        $region52: #{depthwise_conv3x3_s2.1} parent=19 // pred_check_branch
          %370 = sbr.rel (%p368) target = $region54
        $region53: #{depthwise_conv3x3_s2.1} parent=19 // pred_region
          %s371 = sand.u32 %s68, 1
          %s372 = sand.u32 %s68, 1
          %s373 = smul.addr %s372, 96
          %s374 = scalar_lea.vmem [#allocation3], %s373
          %s375 = sadd.s32 %s20, 1
          %s376 = smul.u32 %s375, 8
          %s377 = smul.addr %s376, 6
          %s378 = smul.addr %s19, 408
          %s379 = sadd.s32 %s377, %s378
          %s380 = smul.addr %s379, 8
          %s381 = scalar_lea.vmem %s1, %s380
          // Predicated region
          $region55: #{depthwise_conv3x3_s2.1} parent=53 // pred_check
            _
          $region56: #{depthwise_conv3x3_s2.1} parent=53 // pred_check_branch
            %383 = sbr.rel (0) target = $region58
          $region57: #{depthwise_conv3x3_s2.1} parent=53 // pred_region
            // Predicated region
            $region59: #{depthwise_conv3x3_s2.1} parent=57 // pred_check
              _
            $region60: #{depthwise_conv3x3_s2.1} parent=57 // pred_check_branch
              %385 = sbr.rel (0) target = $region62
            $region61: #{depthwise_conv3x3_s2.1} parent=57 // pred_region
              loop: start=0, step=1, limit=1
              $region63: #{depthwise_conv3x3_s2.1} parent=61 // loop_pre_header
                _
              $region64: #{depthwise_conv3x3_s2.1} parent=61 // loop_header
                %s387 = sphi 0, %s391
                %p388 = scmp.ge.s32.totalorder %s387, 1
                %s392 = sphi %s381, %s381
                %s393 = sphi %s374, %s374
              $region65: #{depthwise_conv3x3_s2.1} parent=61 // loop_header_branch
                %390 = sbr.rel (%p388) target = $region69
              $region66: #{depthwise_conv3x3_s2.1} parent=61 // loop_body
                %v394 = vld [vmem:[%s392] sm:$0xff]
                %395 = vst [vmem:[%s393] sm:$0xff] %v394
                %v396 = vld [vmem:[%s392 + $0x8] sm:$0xff]
                %397 = vst [vmem:[%s393 + $0x8] sm:$0xff] %v396
                %v398 = vld [vmem:[%s392 + $0x10] sm:$0xff]
                %399 = vst [vmem:[%s393 + $0x10] sm:$0xff] %v398
                %v400 = vld [vmem:[%s392 + $0x18] sm:$0xff]
                %401 = vst [vmem:[%s393 + $0x18] sm:$0xff] %v400
                %v402 = vld [vmem:[%s392 + $0x20] sm:$0xff]
                %403 = vst [vmem:[%s393 + $0x20] sm:$0xff] %v402
                %v404 = vld [vmem:[%s392 + $0x28] sm:$0xff]
                %405 = vst [vmem:[%s393 + $0x28] sm:$0xff] %v404
                %v406 = vld [vmem:[%s392 + $0x330] sm:$0xff]
                %407 = vst [vmem:[%s393 + $0x30] sm:$0xff] %v406
                %v408 = vld [vmem:[%s392 + $0x338] sm:$0xff]
                %409 = vst [vmem:[%s393 + $0x38] sm:$0xff] %v408
                %v410 = vld [vmem:[%s392 + $0x340] sm:$0xff]
                %411 = vst [vmem:[%s393 + $0x40] sm:$0xff] %v410
                %v412 = vld [vmem:[%s392 + $0x348] sm:$0xff]
                %413 = vst [vmem:[%s393 + $0x48] sm:$0xff] %v412
                %v414 = vld [vmem:[%s392 + $0x350] sm:$0xff]
                %415 = vst [vmem:[%s393 + $0x50] sm:$0xff] %v414
                %v416 = vld [vmem:[%s392 + $0x358] sm:$0xff]
                %417 = vst [vmem:[%s393 + $0x58] sm:$0xff] %v416
              $region67: #{depthwise_conv3x3_s2.1} parent=61 // loop_footer
                %s391 = sadd.s32 1, %s387
              $region68: #{depthwise_conv3x3_s2.1} parent=61 // loop_footer_branch
                %386 = sbr.rel target = $region64
              $region69: #{depthwise_conv3x3_s2.1} parent=61 // loop_exit
                _
            $region62: #{depthwise_conv3x3_s2.1} parent=57 // pred_fallthru
              _
            // Predicated region
            $region70: #{depthwise_conv3x3_s2.1} parent=57 // pred_check
              _
            $region71: #{depthwise_conv3x3_s2.1} parent=57 // pred_check_branch
              %419 = sbr.rel target = $region73
            $region72: #{depthwise_conv3x3_s2.1} parent=57 // pred_region
              _
            $region73: #{depthwise_conv3x3_s2.1} parent=57 // pred_fallthru
              _
          $region58: #{depthwise_conv3x3_s2.1} parent=53 // pred_fallthru
            _
          %420 = vnop
        $region54: #{depthwise_conv3x3_s2.1} parent=19 // pred_fallthru
          _
      $region20: #{depthwise_conv3x3_s2.1} parent=5 // pred_fallthru
        _
      %p421 = scmp.le.s32.totalorder 1, %s12
      %p422 = scmp.lt.s32.totalorder %s12, 5
      %p423 = pnand %p421, %p422
      %p424 = pneg %p423
      // Predicated region
      $region74: #{depthwise_conv3x3_s2.1} parent=5 // pred_check
        _
      $region75: #{depthwise_conv3x3_s2.1} parent=5 // pred_check_branch
        %426 = sbr.rel (%p423) target = $region77
      $region76: #{depthwise_conv3x3_s2.1} parent=5 // pred_region
        %s427 = ssub.s32 %s12, 1
        %s428 = sand.u32 %s39, 1
        %s429 = sand.u32 %s39, 1
        %s430 = smul.addr %s429, 1536
        %s431 = scalar_lea.vmem [#allocation2], %s430
        // Predicated region
        $region78: #{depthwise_conv3x3_s2.1} parent=76 // pred_check
          %p432 = pneg %p52
        $region79: #{depthwise_conv3x3_s2.1} parent=76 // pred_check_branch
          %434 = sbr.rel (%p432) target = $region81
        $region80: #{depthwise_conv3x3_s2.1} parent=76 // pred_region
          _
        $region81: #{depthwise_conv3x3_s2.1} parent=76 // pred_fallthru
          _
        %s435 = sand.u32 %s71, 1
        %s436 = sand.u32 %s71, 1
        %s437 = smul.addr %s436, 96
        %s438 = scalar_lea.vmem [#allocation3], %s437
        // Predicated region
        $region82: #{depthwise_conv3x3_s2.1} parent=76 // pred_check
          %p439 = pneg %p84
        $region83: #{depthwise_conv3x3_s2.1} parent=76 // pred_check_branch
          %441 = sbr.rel (%p439) target = $region85
        $region84: #{depthwise_conv3x3_s2.1} parent=76 // pred_region
          _
        $region85: #{depthwise_conv3x3_s2.1} parent=76 // pred_fallthru
          _
        %s442 = sand.u32 %s39, 1
        %s443 = sand.u32 %s39, 1
        %s444 = smul.addr %s443, 1536
        %s445 = scalar_lea.vmem [#allocation2], %s444
        %p446 = pneg %p52
        %p447 = pneg %p49
        %s448 = sand.u32 %s71, 1
        %s449 = sand.u32 %s71, 1
        %s450 = smul.addr %s449, 96
        %s451 = scalar_lea.vmem [#allocation3], %s450
        %p452 = pneg %p84
        %p453 = pneg %p81
        %p454 = pneg %p105
        %p455 = pneg %p102
        %p456 = pneg %p133
        %p457 = pneg %p130
        %s458 = sand.u32 %s120, 1
        %s459 = scalar_lea.sflag [#allocation5], %s458
        %s460 = sand.u32 %s120, 1
        %s461 = smul.addr %s460, 256
        %s462 = scalar_lea.vmem [#allocation4], %s461
        %s463 = smul.u32 8, %s22
        %s464 = ssub.s32 17, %s463
        %p465 = scmp.lt.s32.totalorder %s464, 8
        %s466 = scalar_select %p465, %s464, 8
        %s467 = smul.u32 512, %s466
        %s468 = smul.u32 %s467, 3
        %s469 = smul.u32 %s468, 2
        %s470 = sadd.s32 %s22, 1
        %s471 = smul.u32 %s470, 8
        %s472 = smul.u32 8, %s22
        %v473 = vld [vmem:[%s2] sm:$0x3]
        %v474 = vld [vmem:[%s2 + $0x2] sm:$0x3]
        %v475 = vld [vmem:[%s2 + $0x4] sm:$0x3]
        %v476 = vld [vmem:[%s2 + $0x6] sm:$0x3]
        %v477 = vld [vmem:[%s2 + $0x8] sm:$0x3]
        %v478 = vld [vmem:[%s2 + $0xa] sm:$0x3]
        %v479 = vld [vmem:[%s2 + $0xc] sm:$0x3]
        %v480 = vld [vmem:[%s2 + $0xe] sm:$0x3]
        %v481 = vld [vmem:[%s2 + $0x10] sm:$0x3]
        %s482 = scalar_lea.vmem %s431, 48 [#allocation2]
        %v483 = vld [vmem:[%s482] sm:$0xff]
        %v484 = vld [vmem:[%s482 + $0x8] sm:$0xff]
        %v485 = vld [vmem:[%s482 + $0x10] sm:$0xff]
        %v486 = vld [vmem:[%s482 + $0x18] sm:$0xff]
        %v487 = vld [vmem:[%s482 + $0x20] sm:$0x1]
        %v488 = vld [vmem:[%s482 + $0x28] sm:$0x1]
        %v489 = vld [vmem:[%s482 + $0x30] sm:$0xff]
        %v490 = vld [vmem:[%s482 + $0x38] sm:$0xff]
        %v491 = vld [vmem:[%s482 + $0x40] sm:$0xff]
        %v492 = vld [vmem:[%s482 + $0x48] sm:$0xff]
        %v493 = vld [vmem:[%s482 + $0x50] sm:$0x1]
        %v494 = vld [vmem:[%s482 + $0x58] sm:$0x1]
        %v495 = vld [vmem:[%s482 + $0x60] sm:$0xff]
        %v496 = vld [vmem:[%s482 + $0x68] sm:$0xff]
        %v497 = vld [vmem:[%s482 + $0x70] sm:$0xff]
        %v498 = vld [vmem:[%s482 + $0x78] sm:$0xff]
        %v499 = vld [vmem:[%s482 + $0x80] sm:$0x1]
        %v500 = vld [vmem:[%s482 + $0x88] sm:$0x1]
        %v501 = vld [vmem:[%s482 + $0x90] sm:$0xff]
        %v502 = vld [vmem:[%s482 + $0x98] sm:$0xff]
        %v503 = vld [vmem:[%s482 + $0xa0] sm:$0xff]
        %v504 = vld [vmem:[%s482 + $0xa8] sm:$0xff]
        %v505 = vld [vmem:[%s482 + $0xb0] sm:$0x1]
        %v506 = vld [vmem:[%s482 + $0xb8] sm:$0x1]
        %v507 = vld [vmem:[%s482 + $0xc0] sm:$0xff]
        %v508 = vld [vmem:[%s482 + $0xc8] sm:$0xff]
        %v509 = vld [vmem:[%s482 + $0xd0] sm:$0xff]
        %v510 = vld [vmem:[%s482 + $0xd8] sm:$0xff]
        %v511 = vld [vmem:[%s482 + $0xe0] sm:$0x1]
        %v512 = vld [vmem:[%s482 + $0xe8] sm:$0x1]
        %v513 = vld [vmem:[%s482 + $0xf0] sm:$0xff]
        %v514 = vld [vmem:[%s482 + $0xf8] sm:$0xff]
        %v515 = vld [vmem:[%s482 + $0x100] sm:$0xff]
        %v516 = vld [vmem:[%s482 + $0x108] sm:$0xff]
        %v517 = vld [vmem:[%s482 + $0x110] sm:$0x1]
        %v518 = vld [vmem:[%s482 + $0x118] sm:$0x1]
        %v519 = vld [vmem:[%s482 + $0x120] sm:$0xff]
        %v520 = vld [vmem:[%s482 + $0x128] sm:$0xff]
        %v521 = vld [vmem:[%s482 + $0x130] sm:$0xff]
        %v522 = vld [vmem:[%s482 + $0x138] sm:$0xff]
        %v523 = vld [vmem:[%s482 + $0x140] sm:$0x1]
        %v524 = vld [vmem:[%s482 + $0x148] sm:$0x1]
        %v525 = vld [vmem:[%s482 + $0x180] sm:$0xff]
        %v526 = vld [vmem:[%s482 + $0x188] sm:$0xff]
        %v527 = vld [vmem:[%s482 + $0x190] sm:$0xff]
        %v528 = vld [vmem:[%s482 + $0x198] sm:$0xff]
        %v529 = vld [vmem:[%s482 + $0x1b0] sm:$0xff]
        %v530 = vld [vmem:[%s482 + $0x1b8] sm:$0xff]
        %v531 = vld [vmem:[%s482 + $0x1c0] sm:$0xff]
        %v532 = vld [vmem:[%s482 + $0x1c8] sm:$0xff]
        %v533 = vld [vmem:[%s482 + $0x1e0] sm:$0xff]
        %v534 = vld [vmem:[%s482 + $0x1e8] sm:$0xff]
        %v535 = vld [vmem:[%s482 + $0x1f0] sm:$0xff]
        %v536 = vld [vmem:[%s482 + $0x1f8] sm:$0xff]
        %v537 = vld [vmem:[%s482 + $0x210] sm:$0xff]
        %v538 = vld [vmem:[%s482 + $0x218] sm:$0xff]
        %v539 = vld [vmem:[%s482 + $0x220] sm:$0xff]
        %v540 = vld [vmem:[%s482 + $0x228] sm:$0xff]
        %v541 = vld [vmem:[%s482 + $0x240] sm:$0xff]
        %v542 = vld [vmem:[%s482 + $0x248] sm:$0xff]
        %v543 = vld [vmem:[%s482 + $0x250] sm:$0xff]
        %v544 = vld [vmem:[%s482 + $0x258] sm:$0xff]
        %v545 = vld [vmem:[%s482 + $0x270] sm:$0xff]
        %v546 = vld [vmem:[%s482 + $0x278] sm:$0xff]
        %v547 = vld [vmem:[%s482 + $0x280] sm:$0xff]
        %v548 = vld [vmem:[%s482 + $0x288] sm:$0xff]
        %v549 = vld [vmem:[%s482 + $0x2a0] sm:$0xff]
        %v550 = vld [vmem:[%s482 + $0x2a8] sm:$0xff]
        %v551 = vld [vmem:[%s482 + $0x2b0] sm:$0xff]
        %v552 = vld [vmem:[%s482 + $0x2b8] sm:$0xff]
        %v553 = vld [vmem:[%s438] sm:$0xff]
        %v554 = vld [vmem:[%s438 + $0x8] sm:$0xff]
        %v555 = vld [vmem:[%s438 + $0x10] sm:$0xff]
        %v556 = vld [vmem:[%s438 + $0x18] sm:$0xff]
        %v557 = vld [vmem:[%s438 + $0x20] sm:$0x1]
        %v558 = vld [vmem:[%s438 + $0x28] sm:$0x1]
        %v559 = vld [vmem:[%s438 + $0x30] sm:$0xff]
        %v560 = vld [vmem:[%s438 + $0x38] sm:$0xff]
        %v561 = vld [vmem:[%s438 + $0x40] sm:$0xff]
        %v562 = vld [vmem:[%s438 + $0x48] sm:$0xff]
        %v563 = vld [vmem:[%s431] sm:$0xff]
        %v564 = vld [vmem:[%s431 + $0x8] sm:$0xff]
        %v565 = vld [vmem:[%s431 + $0x10] sm:$0xff]
        %v566 = vld [vmem:[%s431 + $0x18] sm:$0xff]
        %v567 = vld [vmem:[%s431 + $0x30] sm:$0xff]
        %v568 = vld [vmem:[%s431 + $0x38] sm:$0xff]
        %v569 = vld [vmem:[%s431 + $0x40] sm:$0xff]
        %v570 = vld [vmem:[%s431 + $0x48] sm:$0xff]
        %v571 = vld [vmem:[%s431 + $0x60] sm:$0xff]
        %v572 = vld [vmem:[%s431 + $0x68] sm:$0xff]
        %v573 = vld [vmem:[%s431 + $0x70] sm:$0xff]
        %v574 = vld [vmem:[%s431 + $0x78] sm:$0xff]
        %v575 = vld [vmem:[%s431 + $0x90] sm:$0xff]
        %v576 = vld [vmem:[%s431 + $0x98] sm:$0xff]
        %v577 = vld [vmem:[%s431 + $0xa0] sm:$0xff]
        %v578 = vld [vmem:[%s431 + $0xa8] sm:$0xff]
        %v579 = vld [vmem:[%s431 + $0xc0] sm:$0xff]
        %v580 = vld [vmem:[%s431 + $0xc8] sm:$0xff]
        %v581 = vld [vmem:[%s431 + $0xd0] sm:$0xff]
        %v582 = vld [vmem:[%s431 + $0xd8] sm:$0xff]
        %v583 = vld [vmem:[%s431 + $0xf0] sm:$0xff]
        %v584 = vld [vmem:[%s431 + $0xf8] sm:$0xff]
        %v585 = vld [vmem:[%s431 + $0x100] sm:$0xff]
        %v586 = vld [vmem:[%s431 + $0x108] sm:$0xff]
        %v587 = vld [vmem:[%s431 + $0x120] sm:$0xff]
        %v588 = vld [vmem:[%s431 + $0x128] sm:$0xff]
        %v589 = vld [vmem:[%s431 + $0x130] sm:$0xff]
        %v590 = vld [vmem:[%s431 + $0x138] sm:$0xff]
        %v591 = vld [vmem:[%s431 + $0x150] sm:$0xff]
        %v592 = vld [vmem:[%s431 + $0x158] sm:$0xff]
        %v593 = vld [vmem:[%s431 + $0x160] sm:$0xff]
        %v594 = vld [vmem:[%s431 + $0x168] sm:$0xff]
        %v596 = vlaneseq
        %v597 = vshrl.u32 %v596, 7
        %v598 = vsub.s32 0, %v597
        %v599 = vrot.slane %v473, %v598
        %v600 = vlaneseq
        %v601 = vshrl.u32 %v600, 7
        %v602 = vsub.s32 1, %v601
        %v603 = vrot.slane %v473, %v602
        %v606 = vmul.f32 %v563, %v599
        %v607 = vmul.f32 %v564, %v603
        %v608 = vmul.f32 %v565, %v599
        %v609 = vmul.f32 %v566, %v603
        %v610 = vmul.f32 %v567, %v599
        %v611 = vmul.f32 %v568, %v603
        %v612 = vmul.f32 %v569, %v599
        %v613 = vmul.f32 %v570, %v603
        %v614 = vmul.f32 %v571, %v599
        %v615 = vmul.f32 %v572, %v603
        %v616 = vmul.f32 %v573, %v599
        %v617 = vmul.f32 %v574, %v603
        %v618 = vmul.f32 %v575, %v599
        %v619 = vmul.f32 %v576, %v603
        %v620 = vmul.f32 %v577, %v599
        %v621 = vmul.f32 %v578, %v603
        %v622 = vmul.f32 %v579, %v599
        %v623 = vmul.f32 %v580, %v603
        %v624 = vmul.f32 %v581, %v599
        %v625 = vmul.f32 %v582, %v603
        %v626 = vmul.f32 %v583, %v599
        %v627 = vmul.f32 %v584, %v603
        %v628 = vmul.f32 %v585, %v599
        %v629 = vmul.f32 %v586, %v603
        %v630 = vmul.f32 %v587, %v599
        %v631 = vmul.f32 %v588, %v603
        %v632 = vmul.f32 %v589, %v599
        %v633 = vmul.f32 %v590, %v603
        %v634 = vmul.f32 %v591, %v599
        %v635 = vmul.f32 %v592, %v603
        %v636 = vmul.f32 %v593, %v599
        %v637 = vmul.f32 %v594, %v603
        %v638 = vadd.f32 %v606, 0.0
        %v639 = vadd.f32 %v607, 0.0
        %v640 = vadd.f32 %v608, 0.0
        %v641 = vadd.f32 %v609, 0.0
        %v642 = vadd.f32 %v610, 0.0
        %v643 = vadd.f32 %v611, 0.0
        %v644 = vadd.f32 %v612, 0.0
        %v645 = vadd.f32 %v613, 0.0
        %v646 = vadd.f32 %v614, 0.0
        %v647 = vadd.f32 %v615, 0.0
        %v648 = vadd.f32 %v616, 0.0
        %v649 = vadd.f32 %v617, 0.0
        %v650 = vadd.f32 %v618, 0.0
        %v651 = vadd.f32 %v619, 0.0
        %v652 = vadd.f32 %v620, 0.0
        %v653 = vadd.f32 %v621, 0.0
        %v654 = vadd.f32 %v622, 0.0
        %v655 = vadd.f32 %v623, 0.0
        %v656 = vadd.f32 %v624, 0.0
        %v657 = vadd.f32 %v625, 0.0
        %v658 = vadd.f32 %v626, 0.0
        %v659 = vadd.f32 %v627, 0.0
        %v660 = vadd.f32 %v628, 0.0
        %v661 = vadd.f32 %v629, 0.0
        %v662 = vadd.f32 %v630, 0.0
        %v663 = vadd.f32 %v631, 0.0
        %v664 = vadd.f32 %v632, 0.0
        %v665 = vadd.f32 %v633, 0.0
        %v666 = vadd.f32 %v634, 0.0
        %v667 = vadd.f32 %v635, 0.0
        %v668 = vadd.f32 %v636, 0.0
        %v669 = vadd.f32 %v637, 0.0
        %s670 = scalar_lea.vmem %s431, 384 [#allocation2]
        %v671 = vld [vmem:[%s670] sm:$0xff]
        %v672 = vld [vmem:[%s670 + $0x8] sm:$0xff]
        %v673 = vld [vmem:[%s670 + $0x10] sm:$0xff]
        %v674 = vld [vmem:[%s670 + $0x18] sm:$0xff]
        %v675 = vld [vmem:[%s670 + $0x30] sm:$0xff]
        %v676 = vld [vmem:[%s670 + $0x38] sm:$0xff]
        %v677 = vld [vmem:[%s670 + $0x40] sm:$0xff]
        %v678 = vld [vmem:[%s670 + $0x48] sm:$0xff]
        %v679 = vld [vmem:[%s670 + $0x60] sm:$0xff]
        %v680 = vld [vmem:[%s670 + $0x68] sm:$0xff]
        %v681 = vld [vmem:[%s670 + $0x70] sm:$0xff]
        %v682 = vld [vmem:[%s670 + $0x78] sm:$0xff]
        %v683 = vld [vmem:[%s670 + $0x90] sm:$0xff]
        %v684 = vld [vmem:[%s670 + $0x98] sm:$0xff]
        %v685 = vld [vmem:[%s670 + $0xa0] sm:$0xff]
        %v686 = vld [vmem:[%s670 + $0xa8] sm:$0xff]
        %v687 = vld [vmem:[%s670 + $0xc0] sm:$0xff]
        %v688 = vld [vmem:[%s670 + $0xc8] sm:$0xff]
        %v689 = vld [vmem:[%s670 + $0xd0] sm:$0xff]
        %v690 = vld [vmem:[%s670 + $0xd8] sm:$0xff]
        %v691 = vld [vmem:[%s670 + $0xf0] sm:$0xff]
        %v692 = vld [vmem:[%s670 + $0xf8] sm:$0xff]
        %v693 = vld [vmem:[%s670 + $0x100] sm:$0xff]
        %v694 = vld [vmem:[%s670 + $0x108] sm:$0xff]
        %v695 = vld [vmem:[%s670 + $0x120] sm:$0xff]
        %v696 = vld [vmem:[%s670 + $0x128] sm:$0xff]
        %v697 = vld [vmem:[%s670 + $0x130] sm:$0xff]
        %v698 = vld [vmem:[%s670 + $0x138] sm:$0xff]
        %v699 = vld [vmem:[%s670 + $0x150] sm:$0xff]
        %v700 = vld [vmem:[%s670 + $0x158] sm:$0xff]
        %v701 = vld [vmem:[%s670 + $0x160] sm:$0xff]
        %v702 = vld [vmem:[%s670 + $0x168] sm:$0xff]
        %v704 = vlaneseq
        %v705 = vshrl.u32 %v704, 7
        %v706 = vsub.s32 0, %v705
        %v707 = vrot.slane %v474, %v706
        %v708 = vlaneseq
        %v709 = vshrl.u32 %v708, 7
        %v710 = vsub.s32 1, %v709
        %v711 = vrot.slane %v474, %v710
        %v714 = vmul.f32 %v671, %v707
        %v715 = vmul.f32 %v672, %v711
        %v716 = vmul.f32 %v673, %v707
        %v717 = vmul.f32 %v674, %v711
        %v718 = vmul.f32 %v675, %v707
        %v719 = vmul.f32 %v676, %v711
        %v720 = vmul.f32 %v677, %v707
        %v721 = vmul.f32 %v678, %v711
        %v722 = vmul.f32 %v679, %v707
        %v723 = vmul.f32 %v680, %v711
        %v724 = vmul.f32 %v681, %v707
        %v725 = vmul.f32 %v682, %v711
        %v726 = vmul.f32 %v683, %v707
        %v727 = vmul.f32 %v684, %v711
        %v728 = vmul.f32 %v685, %v707
        %v729 = vmul.f32 %v686, %v711
        %v730 = vmul.f32 %v687, %v707
        %v731 = vmul.f32 %v688, %v711
        %v732 = vmul.f32 %v689, %v707
        %v733 = vmul.f32 %v690, %v711
        %v734 = vmul.f32 %v691, %v707
        %v735 = vmul.f32 %v692, %v711
        %v736 = vmul.f32 %v693, %v707
        %v737 = vmul.f32 %v694, %v711
        %v738 = vmul.f32 %v695, %v707
        %v739 = vmul.f32 %v696, %v711
        %v740 = vmul.f32 %v697, %v707
        %v741 = vmul.f32 %v698, %v711
        %v742 = vmul.f32 %v699, %v707
        %v743 = vmul.f32 %v700, %v711
        %v744 = vmul.f32 %v701, %v707
        %v745 = vmul.f32 %v702, %v711
        %v746 = vadd.f32 %v638, %v714
        %v747 = vadd.f32 %v639, %v715
        %v748 = vadd.f32 %v640, %v716
        %v749 = vadd.f32 %v641, %v717
        %v750 = vadd.f32 %v642, %v718
        %v751 = vadd.f32 %v643, %v719
        %v752 = vadd.f32 %v644, %v720
        %v753 = vadd.f32 %v645, %v721
        %v754 = vadd.f32 %v646, %v722
        %v755 = vadd.f32 %v647, %v723
        %v756 = vadd.f32 %v648, %v724
        %v757 = vadd.f32 %v649, %v725
        %v758 = vadd.f32 %v650, %v726
        %v759 = vadd.f32 %v651, %v727
        %v760 = vadd.f32 %v652, %v728
        %v761 = vadd.f32 %v653, %v729
        %v762 = vadd.f32 %v654, %v730
        %v763 = vadd.f32 %v655, %v731
        %v764 = vadd.f32 %v656, %v732
        %v765 = vadd.f32 %v657, %v733
        %v766 = vadd.f32 %v658, %v734
        %v767 = vadd.f32 %v659, %v735
        %v768 = vadd.f32 %v660, %v736
        %v769 = vadd.f32 %v661, %v737
        %v770 = vadd.f32 %v662, %v738
        %v771 = vadd.f32 %v663, %v739
        %v772 = vadd.f32 %v664, %v740
        %v773 = vadd.f32 %v665, %v741
        %v774 = vadd.f32 %v666, %v742
        %v775 = vadd.f32 %v667, %v743
        %v776 = vadd.f32 %v668, %v744
        %v777 = vadd.f32 %v669, %v745
        %v778 = vld [vmem:[%s431] sm:$0xfe]
        %v779 = vld [vmem:[%s431 + $0x8] sm:$0xfe]
        %v780 = vld [vmem:[%s431 + $0x20] sm:$0x1]
        %v781 = vld [vmem:[%s431 + $0x28] sm:$0x1]
        %v782 = vld [vmem:[%s431 + $0x30] sm:$0xfe]
        %v783 = vld [vmem:[%s431 + $0x38] sm:$0xfe]
        %v784 = vld [vmem:[%s431 + $0x50] sm:$0x1]
        %v785 = vld [vmem:[%s431 + $0x58] sm:$0x1]
        %v786 = vld [vmem:[%s431 + $0x60] sm:$0xfe]
        %v787 = vld [vmem:[%s431 + $0x68] sm:$0xfe]
        %v788 = vld [vmem:[%s431 + $0x80] sm:$0x1]
        %v789 = vld [vmem:[%s431 + $0x88] sm:$0x1]
        %v790 = vld [vmem:[%s431 + $0x90] sm:$0xfe]
        %v791 = vld [vmem:[%s431 + $0x98] sm:$0xfe]
        %v792 = vld [vmem:[%s431 + $0xb0] sm:$0x1]
        %v793 = vld [vmem:[%s431 + $0xb8] sm:$0x1]
        %v794 = vld [vmem:[%s431 + $0xc0] sm:$0xfe]
        %v795 = vld [vmem:[%s431 + $0xc8] sm:$0xfe]
        %v796 = vld [vmem:[%s431 + $0xe0] sm:$0x1]
        %v797 = vld [vmem:[%s431 + $0xe8] sm:$0x1]
        %v798 = vld [vmem:[%s431 + $0xf0] sm:$0xfe]
        %v799 = vld [vmem:[%s431 + $0xf8] sm:$0xfe]
        %v800 = vld [vmem:[%s431 + $0x110] sm:$0x1]
        %v801 = vld [vmem:[%s431 + $0x118] sm:$0x1]
        %v802 = vld [vmem:[%s431 + $0x120] sm:$0xfe]
        %v803 = vld [vmem:[%s431 + $0x128] sm:$0xfe]
        %v804 = vld [vmem:[%s431 + $0x140] sm:$0x1]
        %v805 = vld [vmem:[%s431 + $0x148] sm:$0x1]
        %v806 = vld [vmem:[%s431 + $0x150] sm:$0xfe]
        %v807 = vld [vmem:[%s431 + $0x158] sm:$0xfe]
        %v808 = vld [vmem:[%s431 + $0x170] sm:$0x1]
        %v809 = vld [vmem:[%s431 + $0x178] sm:$0x1]
        %v811 = vlaneseq
        %v812 = vshrl.u32 %v811, 7
        %v813 = vsub.s32 0, %v812
        %v814 = vrot.slane %v475, %v813
        %v815 = vlaneseq
        %v816 = vshrl.u32 %v815, 7
        %v817 = vsub.s32 1, %v816
        %v818 = vrot.slane %v475, %v817
        %v821 = vmul.f32 %v778, %v814
        %v822 = vmul.f32 %v779, %v818
        %v823 = vmul.f32 %v565, %v814
        %v824 = vmul.f32 %v566, %v818
        %v825 = vmul.f32 %v780, %v814
        %v826 = vmul.f32 %v781, %v818
        %v827 = vmul.f32 %v782, %v814
        %v828 = vmul.f32 %v783, %v818
        %v829 = vmul.f32 %v569, %v814
        %v830 = vmul.f32 %v570, %v818
        %v831 = vmul.f32 %v784, %v814
        %v832 = vmul.f32 %v785, %v818
        %v833 = vmul.f32 %v786, %v814
        %v834 = vmul.f32 %v787, %v818
        %v835 = vmul.f32 %v573, %v814
        %v836 = vmul.f32 %v574, %v818
        %v837 = vmul.f32 %v788, %v814
        %v838 = vmul.f32 %v789, %v818
        %v839 = vmul.f32 %v790, %v814
        %v840 = vmul.f32 %v791, %v818
        %v841 = vmul.f32 %v577, %v814
        %v842 = vmul.f32 %v578, %v818
        %v843 = vmul.f32 %v792, %v814
        %v844 = vmul.f32 %v793, %v818
        %v845 = vmul.f32 %v794, %v814
        %v846 = vmul.f32 %v795, %v818
        %v847 = vmul.f32 %v581, %v814
        %v848 = vmul.f32 %v582, %v818
        %v849 = vmul.f32 %v796, %v814
        %v850 = vmul.f32 %v797, %v818
        %v851 = vmul.f32 %v798, %v814
        %v852 = vmul.f32 %v799, %v818
        %v853 = vmul.f32 %v585, %v814
        %v854 = vmul.f32 %v586, %v818
        %v855 = vmul.f32 %v800, %v814
        %v856 = vmul.f32 %v801, %v818
        %v857 = vmul.f32 %v802, %v814
        %v858 = vmul.f32 %v803, %v818
        %v859 = vmul.f32 %v589, %v814
        %v860 = vmul.f32 %v590, %v818
        %v861 = vmul.f32 %v804, %v814
        %v862 = vmul.f32 %v805, %v818
        %v863 = vmul.f32 %v806, %v814
        %v864 = vmul.f32 %v807, %v818
        %v865 = vmul.f32 %v593, %v814
        %v866 = vmul.f32 %v594, %v818
        %v867 = vmul.f32 %v808, %v814
        %v868 = vmul.f32 %v809, %v818
        %vm917 = vcmask 1046528
        %v918 = vrot.slane %v821, 1
        %v919 = vrot.slane %v823, 1
        %v920 = vsel %vm917, %v918, %v919
        %v921 = vrot.slane %v822, 1
        %v922 = vrot.slane %v824, 1
        %v923 = vsel %vm917, %v921, %v922
        %v924 = vrot.slane %v825, 1
        %v925 = vsel %vm917, %v919, %v924
        %v926 = vrot.slane %v826, 1
        %v927 = vsel %vm917, %v922, %v926
        %v928 = vrot.slane %v827, 1
        %v929 = vrot.slane %v829, 1
        %v930 = vsel %vm917, %v928, %v929
        %v931 = vrot.slane %v828, 1
        %v932 = vrot.slane %v830, 1
        %v933 = vsel %vm917, %v931, %v932
        %v934 = vrot.slane %v831, 1
        %v935 = vsel %vm917, %v929, %v934
        %v936 = vrot.slane %v832, 1
        %v937 = vsel %vm917, %v932, %v936
        %v938 = vrot.slane %v833, 1
        %v939 = vrot.slane %v835, 1
        %v940 = vsel %vm917, %v938, %v939
        %v941 = vrot.slane %v834, 1
        %v942 = vrot.slane %v836, 1
        %v943 = vsel %vm917, %v941, %v942
        %v944 = vrot.slane %v837, 1
        %v945 = vsel %vm917, %v939, %v944
        %v946 = vrot.slane %v838, 1
        %v947 = vsel %vm917, %v942, %v946
        %v948 = vrot.slane %v839, 1
        %v949 = vrot.slane %v841, 1
        %v950 = vsel %vm917, %v948, %v949
        %v951 = vrot.slane %v840, 1
        %v952 = vrot.slane %v842, 1
        %v953 = vsel %vm917, %v951, %v952
        %v954 = vrot.slane %v843, 1
        %v955 = vsel %vm917, %v949, %v954
        %v956 = vrot.slane %v844, 1
        %v957 = vsel %vm917, %v952, %v956
        %v958 = vrot.slane %v845, 1
        %v959 = vrot.slane %v847, 1
        %v960 = vsel %vm917, %v958, %v959
        %v961 = vrot.slane %v846, 1
        %v962 = vrot.slane %v848, 1
        %v963 = vsel %vm917, %v961, %v962
        %v964 = vrot.slane %v849, 1
        %v965 = vsel %vm917, %v959, %v964
        %v966 = vrot.slane %v850, 1
        %v967 = vsel %vm917, %v962, %v966
        %v968 = vrot.slane %v851, 1
        %v969 = vrot.slane %v853, 1
        %v970 = vsel %vm917, %v968, %v969
        %v971 = vrot.slane %v852, 1
        %v972 = vrot.slane %v854, 1
        %v973 = vsel %vm917, %v971, %v972
        %v974 = vrot.slane %v855, 1
        %v975 = vsel %vm917, %v969, %v974
        %v976 = vrot.slane %v856, 1
        %v977 = vsel %vm917, %v972, %v976
        %v978 = vrot.slane %v857, 1
        %v979 = vrot.slane %v859, 1
        %v980 = vsel %vm917, %v978, %v979
        %v981 = vrot.slane %v858, 1
        %v982 = vrot.slane %v860, 1
        %v983 = vsel %vm917, %v981, %v982
        %v984 = vrot.slane %v861, 1
        %v985 = vsel %vm917, %v979, %v984
        %v986 = vrot.slane %v862, 1
        %v987 = vsel %vm917, %v982, %v986
        %v988 = vrot.slane %v863, 1
        %v989 = vrot.slane %v865, 1
        %v990 = vsel %vm917, %v988, %v989
        %v991 = vrot.slane %v864, 1
        %v992 = vrot.slane %v866, 1
        %v993 = vsel %vm917, %v991, %v992
        %v994 = vrot.slane %v867, 1
        %v995 = vsel %vm917, %v989, %v994
        %v996 = vrot.slane %v868, 1
        %v997 = vsel %vm917, %v992, %v996
        %v1030 = vadd.f32 %v746, %v920
        %v1031 = vadd.f32 %v747, %v923
        %v1032 = vadd.f32 %v748, %v925
        %v1033 = vadd.f32 %v749, %v927
        %v1034 = vadd.f32 %v750, %v930
        %v1035 = vadd.f32 %v751, %v933
        %v1036 = vadd.f32 %v752, %v935
        %v1037 = vadd.f32 %v753, %v937
        %v1038 = vadd.f32 %v754, %v940
        %v1039 = vadd.f32 %v755, %v943
        %v1040 = vadd.f32 %v756, %v945
        %v1041 = vadd.f32 %v757, %v947
        %v1042 = vadd.f32 %v758, %v950
        %v1043 = vadd.f32 %v759, %v953
        %v1044 = vadd.f32 %v760, %v955
        %v1045 = vadd.f32 %v761, %v957
        %v1046 = vadd.f32 %v762, %v960
        %v1047 = vadd.f32 %v763, %v963
        %v1048 = vadd.f32 %v764, %v965
        %v1049 = vadd.f32 %v765, %v967
        %v1050 = vadd.f32 %v766, %v970
        %v1051 = vadd.f32 %v767, %v973
        %v1052 = vadd.f32 %v768, %v975
        %v1053 = vadd.f32 %v769, %v977
        %v1054 = vadd.f32 %v770, %v980
        %v1055 = vadd.f32 %v771, %v983
        %v1056 = vadd.f32 %v772, %v985
        %v1057 = vadd.f32 %v773, %v987
        %v1058 = vadd.f32 %v774, %v990
        %v1059 = vadd.f32 %v775, %v993
        %v1060 = vadd.f32 %v776, %v995
        %v1061 = vadd.f32 %v777, %v997
        %s1062 = scalar_lea.vmem %s431, 768 [#allocation2]
        %v1063 = vld [vmem:[%s1062] sm:$0xff]
        %v1064 = vld [vmem:[%s1062 + $0x8] sm:$0xff]
        %v1065 = vld [vmem:[%s1062 + $0x10] sm:$0xff]
        %v1066 = vld [vmem:[%s1062 + $0x18] sm:$0xff]
        %v1067 = vld [vmem:[%s1062 + $0x30] sm:$0xff]
        %v1068 = vld [vmem:[%s1062 + $0x38] sm:$0xff]
        %v1069 = vld [vmem:[%s1062 + $0x40] sm:$0xff]
        %v1070 = vld [vmem:[%s1062 + $0x48] sm:$0xff]
        %v1071 = vld [vmem:[%s1062 + $0x60] sm:$0xff]
        %v1072 = vld [vmem:[%s1062 + $0x68] sm:$0xff]
        %v1073 = vld [vmem:[%s1062 + $0x70] sm:$0xff]
        %v1074 = vld [vmem:[%s1062 + $0x78] sm:$0xff]
        %v1075 = vld [vmem:[%s1062 + $0x90] sm:$0xff]
        %v1076 = vld [vmem:[%s1062 + $0x98] sm:$0xff]
        %v1077 = vld [vmem:[%s1062 + $0xa0] sm:$0xff]
        %v1078 = vld [vmem:[%s1062 + $0xa8] sm:$0xff]
        %v1079 = vld [vmem:[%s1062 + $0xc0] sm:$0xff]
        %v1080 = vld [vmem:[%s1062 + $0xc8] sm:$0xff]
        %v1081 = vld [vmem:[%s1062 + $0xd0] sm:$0xff]
        %v1082 = vld [vmem:[%s1062 + $0xd8] sm:$0xff]
        %v1083 = vld [vmem:[%s1062 + $0xf0] sm:$0xff]
        %v1084 = vld [vmem:[%s1062 + $0xf8] sm:$0xff]
        %v1085 = vld [vmem:[%s1062 + $0x100] sm:$0xff]
        %v1086 = vld [vmem:[%s1062 + $0x108] sm:$0xff]
        %v1087 = vld [vmem:[%s1062 + $0x120] sm:$0xff]
        %v1088 = vld [vmem:[%s1062 + $0x128] sm:$0xff]
        %v1089 = vld [vmem:[%s1062 + $0x130] sm:$0xff]
        %v1090 = vld [vmem:[%s1062 + $0x138] sm:$0xff]
        %v1091 = vld [vmem:[%s1062 + $0x150] sm:$0xff]
        %v1092 = vld [vmem:[%s1062 + $0x158] sm:$0xff]
        %v1093 = vld [vmem:[%s1062 + $0x160] sm:$0xff]
        %v1094 = vld [vmem:[%s1062 + $0x168] sm:$0xff]
        %v1096 = vlaneseq
        %v1097 = vshrl.u32 %v1096, 7
        %v1098 = vsub.s32 0, %v1097
        %v1099 = vrot.slane %v476, %v1098
        %v1100 = vlaneseq
        %v1101 = vshrl.u32 %v1100, 7
        %v1102 = vsub.s32 1, %v1101
        %v1103 = vrot.slane %v476, %v1102
        %v1106 = vmul.f32 %v1063, %v1099
        %v1107 = vmul.f32 %v1064, %v1103
        %v1108 = vmul.f32 %v1065, %v1099
        %v1109 = vmul.f32 %v1066, %v1103
        %v1110 = vmul.f32 %v1067, %v1099
        %v1111 = vmul.f32 %v1068, %v1103
        %v1112 = vmul.f32 %v1069, %v1099
        %v1113 = vmul.f32 %v1070, %v1103
        %v1114 = vmul.f32 %v1071, %v1099
        %v1115 = vmul.f32 %v1072, %v1103
        %v1116 = vmul.f32 %v1073, %v1099
        %v1117 = vmul.f32 %v1074, %v1103
        %v1118 = vmul.f32 %v1075, %v1099
        %v1119 = vmul.f32 %v1076, %v1103
        %v1120 = vmul.f32 %v1077, %v1099
        %v1121 = vmul.f32 %v1078, %v1103
        %v1122 = vmul.f32 %v1079, %v1099
        %v1123 = vmul.f32 %v1080, %v1103
        %v1124 = vmul.f32 %v1081, %v1099
        %v1125 = vmul.f32 %v1082, %v1103
        %v1126 = vmul.f32 %v1083, %v1099
        %v1127 = vmul.f32 %v1084, %v1103
        %v1128 = vmul.f32 %v1085, %v1099
        %v1129 = vmul.f32 %v1086, %v1103
        %v1130 = vmul.f32 %v1087, %v1099
        %v1131 = vmul.f32 %v1088, %v1103
        %v1132 = vmul.f32 %v1089, %v1099
        %v1133 = vmul.f32 %v1090, %v1103
        %v1134 = vmul.f32 %v1091, %v1099
        %v1135 = vmul.f32 %v1092, %v1103
        %v1136 = vmul.f32 %v1093, %v1099
        %v1137 = vmul.f32 %v1094, %v1103
        %v1138 = vadd.f32 %v1030, %v1106
        %v1139 = vadd.f32 %v1031, %v1107
        %v1140 = vadd.f32 %v1032, %v1108
        %v1141 = vadd.f32 %v1033, %v1109
        %v1142 = vadd.f32 %v1034, %v1110
        %v1143 = vadd.f32 %v1035, %v1111
        %v1144 = vadd.f32 %v1036, %v1112
        %v1145 = vadd.f32 %v1037, %v1113
        %v1146 = vadd.f32 %v1038, %v1114
        %v1147 = vadd.f32 %v1039, %v1115
        %v1148 = vadd.f32 %v1040, %v1116
        %v1149 = vadd.f32 %v1041, %v1117
        %v1150 = vadd.f32 %v1042, %v1118
        %v1151 = vadd.f32 %v1043, %v1119
        %v1152 = vadd.f32 %v1044, %v1120
        %v1153 = vadd.f32 %v1045, %v1121
        %v1154 = vadd.f32 %v1046, %v1122
        %v1155 = vadd.f32 %v1047, %v1123
        %v1156 = vadd.f32 %v1048, %v1124
        %v1157 = vadd.f32 %v1049, %v1125
        %v1158 = vadd.f32 %v1050, %v1126
        %v1159 = vadd.f32 %v1051, %v1127
        %v1160 = vadd.f32 %v1052, %v1128
        %v1161 = vadd.f32 %v1053, %v1129
        %v1162 = vadd.f32 %v1054, %v1130
        %v1163 = vadd.f32 %v1055, %v1131
        %v1164 = vadd.f32 %v1056, %v1132
        %v1165 = vadd.f32 %v1057, %v1133
        %v1166 = vadd.f32 %v1058, %v1134
        %v1167 = vadd.f32 %v1059, %v1135
        %v1168 = vadd.f32 %v1060, %v1136
        %v1169 = vadd.f32 %v1061, %v1137
        %s1170 = scalar_lea.vmem %s431, 1152 [#allocation2]
        %v1171 = vld [vmem:[%s1170] sm:$0xff]
        %v1172 = vld [vmem:[%s1170 + $0x8] sm:$0xff]
        %v1173 = vld [vmem:[%s1170 + $0x10] sm:$0xff]
        %v1174 = vld [vmem:[%s1170 + $0x18] sm:$0xff]
        %v1175 = vld [vmem:[%s1170 + $0x30] sm:$0xff]
        %v1176 = vld [vmem:[%s1170 + $0x38] sm:$0xff]
        %v1177 = vld [vmem:[%s1170 + $0x40] sm:$0xff]
        %v1178 = vld [vmem:[%s1170 + $0x48] sm:$0xff]
        %v1179 = vld [vmem:[%s1170 + $0x60] sm:$0xff]
        %v1180 = vld [vmem:[%s1170 + $0x68] sm:$0xff]
        %v1181 = vld [vmem:[%s1170 + $0x70] sm:$0xff]
        %v1182 = vld [vmem:[%s1170 + $0x78] sm:$0xff]
        %v1183 = vld [vmem:[%s1170 + $0x90] sm:$0xff]
        %v1184 = vld [vmem:[%s1170 + $0x98] sm:$0xff]
        %v1185 = vld [vmem:[%s1170 + $0xa0] sm:$0xff]
        %v1186 = vld [vmem:[%s1170 + $0xa8] sm:$0xff]
        %v1187 = vld [vmem:[%s1170 + $0xc0] sm:$0xff]
        %v1188 = vld [vmem:[%s1170 + $0xc8] sm:$0xff]
        %v1189 = vld [vmem:[%s1170 + $0xd0] sm:$0xff]
        %v1190 = vld [vmem:[%s1170 + $0xd8] sm:$0xff]
        %v1191 = vld [vmem:[%s1170 + $0xf0] sm:$0xff]
        %v1192 = vld [vmem:[%s1170 + $0xf8] sm:$0xff]
        %v1193 = vld [vmem:[%s1170 + $0x100] sm:$0xff]
        %v1194 = vld [vmem:[%s1170 + $0x108] sm:$0xff]
        %v1195 = vld [vmem:[%s1170 + $0x120] sm:$0xff]
        %v1196 = vld [vmem:[%s1170 + $0x128] sm:$0xff]
        %v1197 = vld [vmem:[%s1170 + $0x130] sm:$0xff]
        %v1198 = vld [vmem:[%s1170 + $0x138] sm:$0xff]
        %v1199 = vld [vmem:[%s1170 + $0x150] sm:$0xff]
        %v1200 = vld [vmem:[%s1170 + $0x158] sm:$0xff]
        %v1201 = vld [vmem:[%s1170 + $0x160] sm:$0xff]
        %v1202 = vld [vmem:[%s1170 + $0x168] sm:$0xff]
        %v1204 = vlaneseq
        %v1205 = vshrl.u32 %v1204, 7
        %v1206 = vsub.s32 0, %v1205
        %v1207 = vrot.slane %v477, %v1206
        %v1208 = vlaneseq
        %v1209 = vshrl.u32 %v1208, 7
        %v1210 = vsub.s32 1, %v1209
        %v1211 = vrot.slane %v477, %v1210
        %v1214 = vmul.f32 %v1171, %v1207
        %v1215 = vmul.f32 %v1172, %v1211
        %v1216 = vmul.f32 %v1173, %v1207
        %v1217 = vmul.f32 %v1174, %v1211
        %v1218 = vmul.f32 %v1175, %v1207
        %v1219 = vmul.f32 %v1176, %v1211
        %v1220 = vmul.f32 %v1177, %v1207
        %v1221 = vmul.f32 %v1178, %v1211
        %v1222 = vmul.f32 %v1179, %v1207
        %v1223 = vmul.f32 %v1180, %v1211
        %v1224 = vmul.f32 %v1181, %v1207
        %v1225 = vmul.f32 %v1182, %v1211
        %v1226 = vmul.f32 %v1183, %v1207
        %v1227 = vmul.f32 %v1184, %v1211
        %v1228 = vmul.f32 %v1185, %v1207
        %v1229 = vmul.f32 %v1186, %v1211
        %v1230 = vmul.f32 %v1187, %v1207
        %v1231 = vmul.f32 %v1188, %v1211
        %v1232 = vmul.f32 %v1189, %v1207
        %v1233 = vmul.f32 %v1190, %v1211
        %v1234 = vmul.f32 %v1191, %v1207
        %v1235 = vmul.f32 %v1192, %v1211
        %v1236 = vmul.f32 %v1193, %v1207
        %v1237 = vmul.f32 %v1194, %v1211
        %v1238 = vmul.f32 %v1195, %v1207
        %v1239 = vmul.f32 %v1196, %v1211
        %v1240 = vmul.f32 %v1197, %v1207
        %v1241 = vmul.f32 %v1198, %v1211
        %v1242 = vmul.f32 %v1199, %v1207
        %v1243 = vmul.f32 %v1200, %v1211
        %v1244 = vmul.f32 %v1201, %v1207
        %v1245 = vmul.f32 %v1202, %v1211
        %v1246 = vadd.f32 %v1138, %v1214
        %v1247 = vadd.f32 %v1139, %v1215
        %v1248 = vadd.f32 %v1140, %v1216
        %v1249 = vadd.f32 %v1141, %v1217
        %v1250 = vadd.f32 %v1142, %v1218
        %v1251 = vadd.f32 %v1143, %v1219
        %v1252 = vadd.f32 %v1144, %v1220
        %v1253 = vadd.f32 %v1145, %v1221
        %v1254 = vadd.f32 %v1146, %v1222
        %v1255 = vadd.f32 %v1147, %v1223
        %v1256 = vadd.f32 %v1148, %v1224
        %v1257 = vadd.f32 %v1149, %v1225
        %v1258 = vadd.f32 %v1150, %v1226
        %v1259 = vadd.f32 %v1151, %v1227
        %v1260 = vadd.f32 %v1152, %v1228
        %v1261 = vadd.f32 %v1153, %v1229
        %v1262 = vadd.f32 %v1154, %v1230
        %v1263 = vadd.f32 %v1155, %v1231
        %v1264 = vadd.f32 %v1156, %v1232
        %v1265 = vadd.f32 %v1157, %v1233
        %v1266 = vadd.f32 %v1158, %v1234
        %v1267 = vadd.f32 %v1159, %v1235
        %v1268 = vadd.f32 %v1160, %v1236
        %v1269 = vadd.f32 %v1161, %v1237
        %v1270 = vadd.f32 %v1162, %v1238
        %v1271 = vadd.f32 %v1163, %v1239
        %v1272 = vadd.f32 %v1164, %v1240
        %v1273 = vadd.f32 %v1165, %v1241
        %v1274 = vadd.f32 %v1166, %v1242
        %v1275 = vadd.f32 %v1167, %v1243
        %v1276 = vadd.f32 %v1168, %v1244
        %v1277 = vadd.f32 %v1169, %v1245
        %v1278 = vld [vmem:[%s1062] sm:$0xfe]
        %v1279 = vld [vmem:[%s1062 + $0x8] sm:$0xfe]
        %v1280 = vld [vmem:[%s1062 + $0x20] sm:$0x1]
        %v1281 = vld [vmem:[%s1062 + $0x28] sm:$0x1]
        %v1282 = vld [vmem:[%s1062 + $0x30] sm:$0xfe]
        %v1283 = vld [vmem:[%s1062 + $0x38] sm:$0xfe]
        %v1284 = vld [vmem:[%s1062 + $0x50] sm:$0x1]
        %v1285 = vld [vmem:[%s1062 + $0x58] sm:$0x1]
        %v1286 = vld [vmem:[%s1062 + $0x60] sm:$0xfe]
        %v1287 = vld [vmem:[%s1062 + $0x68] sm:$0xfe]
        %v1288 = vld [vmem:[%s1062 + $0x80] sm:$0x1]
        %v1289 = vld [vmem:[%s1062 + $0x88] sm:$0x1]
        %v1290 = vld [vmem:[%s1062 + $0x90] sm:$0xfe]
        %v1291 = vld [vmem:[%s1062 + $0x98] sm:$0xfe]
        %v1292 = vld [vmem:[%s1062 + $0xb0] sm:$0x1]
        %v1293 = vld [vmem:[%s1062 + $0xb8] sm:$0x1]
        %v1294 = vld [vmem:[%s1062 + $0xc0] sm:$0xfe]
        %v1295 = vld [vmem:[%s1062 + $0xc8] sm:$0xfe]
        %v1296 = vld [vmem:[%s1062 + $0xe0] sm:$0x1]
        %v1297 = vld [vmem:[%s1062 + $0xe8] sm:$0x1]
        %v1298 = vld [vmem:[%s1062 + $0xf0] sm:$0xfe]
        %v1299 = vld [vmem:[%s1062 + $0xf8] sm:$0xfe]
        %v1300 = vld [vmem:[%s1062 + $0x110] sm:$0x1]
        %v1301 = vld [vmem:[%s1062 + $0x118] sm:$0x1]
        %v1302 = vld [vmem:[%s1062 + $0x120] sm:$0xfe]
        %v1303 = vld [vmem:[%s1062 + $0x128] sm:$0xfe]
        %v1304 = vld [vmem:[%s1062 + $0x140] sm:$0x1]
        %v1305 = vld [vmem:[%s1062 + $0x148] sm:$0x1]
        %v1306 = vld [vmem:[%s1062 + $0x150] sm:$0xfe]
        %v1307 = vld [vmem:[%s1062 + $0x158] sm:$0xfe]
        %v1308 = vld [vmem:[%s1062 + $0x170] sm:$0x1]
        %v1309 = vld [vmem:[%s1062 + $0x178] sm:$0x1]
        %v1311 = vlaneseq
        %v1312 = vshrl.u32 %v1311, 7
        %v1313 = vsub.s32 0, %v1312
        %v1314 = vrot.slane %v478, %v1313
        %v1315 = vlaneseq
        %v1316 = vshrl.u32 %v1315, 7
        %v1317 = vsub.s32 1, %v1316
        %v1318 = vrot.slane %v478, %v1317
        %v1321 = vmul.f32 %v1278, %v1314
        %v1322 = vmul.f32 %v1279, %v1318
        %v1323 = vmul.f32 %v1065, %v1314
        %v1324 = vmul.f32 %v1066, %v1318
        %v1325 = vmul.f32 %v1280, %v1314
        %v1326 = vmul.f32 %v1281, %v1318
        %v1327 = vmul.f32 %v1282, %v1314
        %v1328 = vmul.f32 %v1283, %v1318
        %v1329 = vmul.f32 %v1069, %v1314
        %v1330 = vmul.f32 %v1070, %v1318
        %v1331 = vmul.f32 %v1284, %v1314
        %v1332 = vmul.f32 %v1285, %v1318
        %v1333 = vmul.f32 %v1286, %v1314
        %v1334 = vmul.f32 %v1287, %v1318
        %v1335 = vmul.f32 %v1073, %v1314
        %v1336 = vmul.f32 %v1074, %v1318
        %v1337 = vmul.f32 %v1288, %v1314
        %v1338 = vmul.f32 %v1289, %v1318
        %v1339 = vmul.f32 %v1290, %v1314
        %v1340 = vmul.f32 %v1291, %v1318
        %v1341 = vmul.f32 %v1077, %v1314
        %v1342 = vmul.f32 %v1078, %v1318
        %v1343 = vmul.f32 %v1292, %v1314
        %v1344 = vmul.f32 %v1293, %v1318
        %v1345 = vmul.f32 %v1294, %v1314
        %v1346 = vmul.f32 %v1295, %v1318
        %v1347 = vmul.f32 %v1081, %v1314
        %v1348 = vmul.f32 %v1082, %v1318
        %v1349 = vmul.f32 %v1296, %v1314
        %v1350 = vmul.f32 %v1297, %v1318
        %v1351 = vmul.f32 %v1298, %v1314
        %v1352 = vmul.f32 %v1299, %v1318
        %v1353 = vmul.f32 %v1085, %v1314
        %v1354 = vmul.f32 %v1086, %v1318
        %v1355 = vmul.f32 %v1300, %v1314
        %v1356 = vmul.f32 %v1301, %v1318
        %v1357 = vmul.f32 %v1302, %v1314
        %v1358 = vmul.f32 %v1303, %v1318
        %v1359 = vmul.f32 %v1089, %v1314
        %v1360 = vmul.f32 %v1090, %v1318
        %v1361 = vmul.f32 %v1304, %v1314
        %v1362 = vmul.f32 %v1305, %v1318
        %v1363 = vmul.f32 %v1306, %v1314
        %v1364 = vmul.f32 %v1307, %v1318
        %v1365 = vmul.f32 %v1093, %v1314
        %v1366 = vmul.f32 %v1094, %v1318
        %v1367 = vmul.f32 %v1308, %v1314
        %v1368 = vmul.f32 %v1309, %v1318
        %v1417 = vrot.slane %v1321, 1
        %v1418 = vrot.slane %v1323, 1
        %v1419 = vsel %vm917, %v1417, %v1418
        %v1420 = vrot.slane %v1322, 1
        %v1421 = vrot.slane %v1324, 1
        %v1422 = vsel %vm917, %v1420, %v1421
        %v1423 = vrot.slane %v1325, 1
        %v1424 = vsel %vm917, %v1418, %v1423
        %v1425 = vrot.slane %v1326, 1
        %v1426 = vsel %vm917, %v1421, %v1425
        %v1427 = vrot.slane %v1327, 1
        %v1428 = vrot.slane %v1329, 1
        %v1429 = vsel %vm917, %v1427, %v1428
        %v1430 = vrot.slane %v1328, 1
        %v1431 = vrot.slane %v1330, 1
        %v1432 = vsel %vm917, %v1430, %v1431
        %v1433 = vrot.slane %v1331, 1
        %v1434 = vsel %vm917, %v1428, %v1433
        %v1435 = vrot.slane %v1332, 1
        %v1436 = vsel %vm917, %v1431, %v1435
        %v1437 = vrot.slane %v1333, 1
        %v1438 = vrot.slane %v1335, 1
        %v1439 = vsel %vm917, %v1437, %v1438
        %v1440 = vrot.slane %v1334, 1
        %v1441 = vrot.slane %v1336, 1
        %v1442 = vsel %vm917, %v1440, %v1441
        %v1443 = vrot.slane %v1337, 1
        %v1444 = vsel %vm917, %v1438, %v1443
        %v1445 = vrot.slane %v1338, 1
        %v1446 = vsel %vm917, %v1441, %v1445
        %v1447 = vrot.slane %v1339, 1
        %v1448 = vrot.slane %v1341, 1
        %v1449 = vsel %vm917, %v1447, %v1448
        %v1450 = vrot.slane %v1340, 1
        %v1451 = vrot.slane %v1342, 1
        %v1452 = vsel %vm917, %v1450, %v1451
        %v1453 = vrot.slane %v1343, 1
        %v1454 = vsel %vm917, %v1448, %v1453
        %v1455 = vrot.slane %v1344, 1
        %v1456 = vsel %vm917, %v1451, %v1455
        %v1457 = vrot.slane %v1345, 1
        %v1458 = vrot.slane %v1347, 1
        %v1459 = vsel %vm917, %v1457, %v1458
        %v1460 = vrot.slane %v1346, 1
        %v1461 = vrot.slane %v1348, 1
        %v1462 = vsel %vm917, %v1460, %v1461
        %v1463 = vrot.slane %v1349, 1
        %v1464 = vsel %vm917, %v1458, %v1463
        %v1465 = vrot.slane %v1350, 1
        %v1466 = vsel %vm917, %v1461, %v1465
        %v1467 = vrot.slane %v1351, 1
        %v1468 = vrot.slane %v1353, 1
        %v1469 = vsel %vm917, %v1467, %v1468
        %v1470 = vrot.slane %v1352, 1
        %v1471 = vrot.slane %v1354, 1
        %v1472 = vsel %vm917, %v1470, %v1471
        %v1473 = vrot.slane %v1355, 1
        %v1474 = vsel %vm917, %v1468, %v1473
        %v1475 = vrot.slane %v1356, 1
        %v1476 = vsel %vm917, %v1471, %v1475
        %v1477 = vrot.slane %v1357, 1
        %v1478 = vrot.slane %v1359, 1
        %v1479 = vsel %vm917, %v1477, %v1478
        %v1480 = vrot.slane %v1358, 1
        %v1481 = vrot.slane %v1360, 1
        %v1482 = vsel %vm917, %v1480, %v1481
        %v1483 = vrot.slane %v1361, 1
        %v1484 = vsel %vm917, %v1478, %v1483
        %v1485 = vrot.slane %v1362, 1
        %v1486 = vsel %vm917, %v1481, %v1485
        %v1487 = vrot.slane %v1363, 1
        %v1488 = vrot.slane %v1365, 1
        %v1489 = vsel %vm917, %v1487, %v1488
        %v1490 = vrot.slane %v1364, 1
        %v1491 = vrot.slane %v1366, 1
        %v1492 = vsel %vm917, %v1490, %v1491
        %v1493 = vrot.slane %v1367, 1
        %v1494 = vsel %vm917, %v1488, %v1493
        %v1495 = vrot.slane %v1368, 1
        %v1496 = vsel %vm917, %v1491, %v1495
        %v1529 = vadd.f32 %v1246, %v1419
        %v1530 = vadd.f32 %v1247, %v1422
        %v1531 = vadd.f32 %v1248, %v1424
        %v1532 = vadd.f32 %v1249, %v1426
        %v1533 = vadd.f32 %v1250, %v1429
        %v1534 = vadd.f32 %v1251, %v1432
        %v1535 = vadd.f32 %v1252, %v1434
        %v1536 = vadd.f32 %v1253, %v1436
        %v1537 = vadd.f32 %v1254, %v1439
        %v1538 = vadd.f32 %v1255, %v1442
        %v1539 = vadd.f32 %v1256, %v1444
        %v1540 = vadd.f32 %v1257, %v1446
        %v1541 = vadd.f32 %v1258, %v1449
        %v1542 = vadd.f32 %v1259, %v1452
        %v1543 = vadd.f32 %v1260, %v1454
        %v1544 = vadd.f32 %v1261, %v1456
        %v1545 = vadd.f32 %v1262, %v1459
        %v1546 = vadd.f32 %v1263, %v1462
        %v1547 = vadd.f32 %v1264, %v1464
        %v1548 = vadd.f32 %v1265, %v1466
        %v1549 = vadd.f32 %v1266, %v1469
        %v1550 = vadd.f32 %v1267, %v1472
        %v1551 = vadd.f32 %v1268, %v1474
        %v1552 = vadd.f32 %v1269, %v1476
        %v1553 = vadd.f32 %v1270, %v1479
        %v1554 = vadd.f32 %v1271, %v1482
        %v1555 = vadd.f32 %v1272, %v1484
        %v1556 = vadd.f32 %v1273, %v1486
        %v1557 = vadd.f32 %v1274, %v1489
        %v1558 = vadd.f32 %v1275, %v1492
        %v1559 = vadd.f32 %v1276, %v1494
        %v1560 = vadd.f32 %v1277, %v1496
        %v1562 = vlaneseq
        %v1563 = vshrl.u32 %v1562, 7
        %v1564 = vsub.s32 0, %v1563
        %v1565 = vrot.slane %v479, %v1564
        %v1566 = vlaneseq
        %v1567 = vshrl.u32 %v1566, 7
        %v1568 = vsub.s32 1, %v1567
        %v1569 = vrot.slane %v479, %v1568
        %v1572 = vmul.f32 %v483, %v1565
        %v1573 = vmul.f32 %v484, %v1569
        %v1574 = vmul.f32 %v485, %v1565
        %v1575 = vmul.f32 %v486, %v1569
        %v1576 = vmul.f32 %v489, %v1565
        %v1577 = vmul.f32 %v490, %v1569
        %v1578 = vmul.f32 %v491, %v1565
        %v1579 = vmul.f32 %v492, %v1569
        %v1580 = vmul.f32 %v495, %v1565
        %v1581 = vmul.f32 %v496, %v1569
        %v1582 = vmul.f32 %v497, %v1565
        %v1583 = vmul.f32 %v498, %v1569
        %v1584 = vmul.f32 %v501, %v1565
        %v1585 = vmul.f32 %v502, %v1569
        %v1586 = vmul.f32 %v503, %v1565
        %v1587 = vmul.f32 %v504, %v1569
        %v1588 = vmul.f32 %v507, %v1565
        %v1589 = vmul.f32 %v508, %v1569
        %v1590 = vmul.f32 %v509, %v1565
        %v1591 = vmul.f32 %v510, %v1569
        %v1592 = vmul.f32 %v513, %v1565
        %v1593 = vmul.f32 %v514, %v1569
        %v1594 = vmul.f32 %v515, %v1565
        %v1595 = vmul.f32 %v516, %v1569
        %v1596 = vmul.f32 %v519, %v1565
        %v1597 = vmul.f32 %v520, %v1569
        %v1598 = vmul.f32 %v521, %v1565
        %v1599 = vmul.f32 %v522, %v1569
        %v1600 = vmul.f32 %v553, %v1565
        %v1601 = vmul.f32 %v554, %v1569
        %v1602 = vmul.f32 %v555, %v1565
        %v1603 = vmul.f32 %v556, %v1569
        %v1604 = vadd.f32 %v1529, %v1572
        %v1605 = vadd.f32 %v1530, %v1573
        %v1606 = vadd.f32 %v1531, %v1574
        %v1607 = vadd.f32 %v1532, %v1575
        %v1608 = vadd.f32 %v1533, %v1576
        %v1609 = vadd.f32 %v1534, %v1577
        %v1610 = vadd.f32 %v1535, %v1578
        %v1611 = vadd.f32 %v1536, %v1579
        %v1612 = vadd.f32 %v1537, %v1580
        %v1613 = vadd.f32 %v1538, %v1581
        %v1614 = vadd.f32 %v1539, %v1582
        %v1615 = vadd.f32 %v1540, %v1583
        %v1616 = vadd.f32 %v1541, %v1584
        %v1617 = vadd.f32 %v1542, %v1585
        %v1618 = vadd.f32 %v1543, %v1586
        %v1619 = vadd.f32 %v1544, %v1587
        %v1620 = vadd.f32 %v1545, %v1588
        %v1621 = vadd.f32 %v1546, %v1589
        %v1622 = vadd.f32 %v1547, %v1590
        %v1623 = vadd.f32 %v1548, %v1591
        %v1624 = vadd.f32 %v1549, %v1592
        %v1625 = vadd.f32 %v1550, %v1593
        %v1626 = vadd.f32 %v1551, %v1594
        %v1627 = vadd.f32 %v1552, %v1595
        %v1628 = vadd.f32 %v1553, %v1596
        %v1629 = vadd.f32 %v1554, %v1597
        %v1630 = vadd.f32 %v1555, %v1598
        %v1631 = vadd.f32 %v1556, %v1599
        %v1632 = vadd.f32 %v1557, %v1600
        %v1633 = vadd.f32 %v1558, %v1601
        %v1634 = vadd.f32 %v1559, %v1602
        %v1635 = vadd.f32 %v1560, %v1603
        %v1637 = vlaneseq
        %v1638 = vshrl.u32 %v1637, 7
        %v1639 = vsub.s32 0, %v1638
        %v1640 = vrot.slane %v480, %v1639
        %v1641 = vlaneseq
        %v1642 = vshrl.u32 %v1641, 7
        %v1643 = vsub.s32 1, %v1642
        %v1644 = vrot.slane %v480, %v1643
        %v1647 = vmul.f32 %v525, %v1640
        %v1648 = vmul.f32 %v526, %v1644
        %v1649 = vmul.f32 %v527, %v1640
        %v1650 = vmul.f32 %v528, %v1644
        %v1651 = vmul.f32 %v529, %v1640
        %v1652 = vmul.f32 %v530, %v1644
        %v1653 = vmul.f32 %v531, %v1640
        %v1654 = vmul.f32 %v532, %v1644
        %v1655 = vmul.f32 %v533, %v1640
        %v1656 = vmul.f32 %v534, %v1644
        %v1657 = vmul.f32 %v535, %v1640
        %v1658 = vmul.f32 %v536, %v1644
        %v1659 = vmul.f32 %v537, %v1640
        %v1660 = vmul.f32 %v538, %v1644
        %v1661 = vmul.f32 %v539, %v1640
        %v1662 = vmul.f32 %v540, %v1644
        %v1663 = vmul.f32 %v541, %v1640
        %v1664 = vmul.f32 %v542, %v1644
        %v1665 = vmul.f32 %v543, %v1640
        %v1666 = vmul.f32 %v544, %v1644
        %v1667 = vmul.f32 %v545, %v1640
        %v1668 = vmul.f32 %v546, %v1644
        %v1669 = vmul.f32 %v547, %v1640
        %v1670 = vmul.f32 %v548, %v1644
        %v1671 = vmul.f32 %v549, %v1640
        %v1672 = vmul.f32 %v550, %v1644
        %v1673 = vmul.f32 %v551, %v1640
        %v1674 = vmul.f32 %v552, %v1644
        %v1675 = vmul.f32 %v559, %v1640
        %v1676 = vmul.f32 %v560, %v1644
        %v1677 = vmul.f32 %v561, %v1640
        %v1678 = vmul.f32 %v562, %v1644
        %v1679 = vadd.f32 %v1604, %v1647
        %v1680 = vadd.f32 %v1605, %v1648
        %v1681 = vadd.f32 %v1606, %v1649
        %v1682 = vadd.f32 %v1607, %v1650
        %v1683 = vadd.f32 %v1608, %v1651
        %v1684 = vadd.f32 %v1609, %v1652
        %v1685 = vadd.f32 %v1610, %v1653
        %v1686 = vadd.f32 %v1611, %v1654
        %v1687 = vadd.f32 %v1612, %v1655
        %v1688 = vadd.f32 %v1613, %v1656
        %v1689 = vadd.f32 %v1614, %v1657
        %v1690 = vadd.f32 %v1615, %v1658
        %v1691 = vadd.f32 %v1616, %v1659
        %v1692 = vadd.f32 %v1617, %v1660
        %v1693 = vadd.f32 %v1618, %v1661
        %v1694 = vadd.f32 %v1619, %v1662
        %v1695 = vadd.f32 %v1620, %v1663
        %v1696 = vadd.f32 %v1621, %v1664
        %v1697 = vadd.f32 %v1622, %v1665
        %v1698 = vadd.f32 %v1623, %v1666
        %v1699 = vadd.f32 %v1624, %v1667
        %v1700 = vadd.f32 %v1625, %v1668
        %v1701 = vadd.f32 %v1626, %v1669
        %v1702 = vadd.f32 %v1627, %v1670
        %v1703 = vadd.f32 %v1628, %v1671
        %v1704 = vadd.f32 %v1629, %v1672
        %v1705 = vadd.f32 %v1630, %v1673
        %v1706 = vadd.f32 %v1631, %v1674
        %v1707 = vadd.f32 %v1632, %v1675
        %v1708 = vadd.f32 %v1633, %v1676
        %v1709 = vadd.f32 %v1634, %v1677
        %v1710 = vadd.f32 %v1635, %v1678
        %v1712 = vlaneseq
        %v1713 = vshrl.u32 %v1712, 7
        %v1714 = vsub.s32 0, %v1713
        %v1715 = vrot.slane %v481, %v1714
        %v1716 = vlaneseq
        %v1717 = vshrl.u32 %v1716, 7
        %v1718 = vsub.s32 1, %v1717
        %v1719 = vrot.slane %v481, %v1718
        %v1722 = vmul.f32 %v483, %v1715
        %v1723 = vmul.f32 %v484, %v1719
        %v1724 = vmul.f32 %v485, %v1715
        %v1725 = vmul.f32 %v486, %v1719
        %v1726 = vmul.f32 %v487, %v1715
        %v1727 = vmul.f32 %v488, %v1719
        %v1728 = vmul.f32 %v489, %v1715
        %v1729 = vmul.f32 %v490, %v1719
        %v1730 = vmul.f32 %v491, %v1715
        %v1731 = vmul.f32 %v492, %v1719
        %v1732 = vmul.f32 %v493, %v1715
        %v1733 = vmul.f32 %v494, %v1719
        %v1734 = vmul.f32 %v495, %v1715
        %v1735 = vmul.f32 %v496, %v1719
        %v1736 = vmul.f32 %v497, %v1715
        %v1737 = vmul.f32 %v498, %v1719
        %v1738 = vmul.f32 %v499, %v1715
        %v1739 = vmul.f32 %v500, %v1719
        %v1740 = vmul.f32 %v501, %v1715
        %v1741 = vmul.f32 %v502, %v1719
        %v1742 = vmul.f32 %v503, %v1715
        %v1743 = vmul.f32 %v504, %v1719
        %v1744 = vmul.f32 %v505, %v1715
        %v1745 = vmul.f32 %v506, %v1719
        %v1746 = vmul.f32 %v507, %v1715
        %v1747 = vmul.f32 %v508, %v1719
        %v1748 = vmul.f32 %v509, %v1715
        %v1749 = vmul.f32 %v510, %v1719
        %v1750 = vmul.f32 %v511, %v1715
        %v1751 = vmul.f32 %v512, %v1719
        %v1752 = vmul.f32 %v513, %v1715
        %v1753 = vmul.f32 %v514, %v1719
        %v1754 = vmul.f32 %v515, %v1715
        %v1755 = vmul.f32 %v516, %v1719
        %v1756 = vmul.f32 %v517, %v1715
        %v1757 = vmul.f32 %v518, %v1719
        %v1758 = vmul.f32 %v519, %v1715
        %v1759 = vmul.f32 %v520, %v1719
        %v1760 = vmul.f32 %v521, %v1715
        %v1761 = vmul.f32 %v522, %v1719
        %v1762 = vmul.f32 %v523, %v1715
        %v1763 = vmul.f32 %v524, %v1719
        %v1764 = vmul.f32 %v553, %v1715
        %v1765 = vmul.f32 %v554, %v1719
        %v1766 = vmul.f32 %v555, %v1715
        %v1767 = vmul.f32 %v556, %v1719
        %v1768 = vmul.f32 %v557, %v1715
        %v1769 = vmul.f32 %v558, %v1719
        %v1818 = vrot.slane %v1722, 1
        %v1819 = vrot.slane %v1724, 1
        %v1820 = vsel %vm917, %v1818, %v1819
        %v1821 = vrot.slane %v1723, 1
        %v1822 = vrot.slane %v1725, 1
        %v1823 = vsel %vm917, %v1821, %v1822
        %v1824 = vrot.slane %v1726, 1
        %v1825 = vsel %vm917, %v1819, %v1824
        %v1826 = vrot.slane %v1727, 1
        %v1827 = vsel %vm917, %v1822, %v1826
        %v1828 = vrot.slane %v1728, 1
        %v1829 = vrot.slane %v1730, 1
        %v1830 = vsel %vm917, %v1828, %v1829
        %v1831 = vrot.slane %v1729, 1
        %v1832 = vrot.slane %v1731, 1
        %v1833 = vsel %vm917, %v1831, %v1832
        %v1834 = vrot.slane %v1732, 1
        %v1835 = vsel %vm917, %v1829, %v1834
        %v1836 = vrot.slane %v1733, 1
        %v1837 = vsel %vm917, %v1832, %v1836
        %v1838 = vrot.slane %v1734, 1
        %v1839 = vrot.slane %v1736, 1
        %v1840 = vsel %vm917, %v1838, %v1839
        %v1841 = vrot.slane %v1735, 1
        %v1842 = vrot.slane %v1737, 1
        %v1843 = vsel %vm917, %v1841, %v1842
        %v1844 = vrot.slane %v1738, 1
        %v1845 = vsel %vm917, %v1839, %v1844
        %v1846 = vrot.slane %v1739, 1
        %v1847 = vsel %vm917, %v1842, %v1846
        %v1848 = vrot.slane %v1740, 1
        %v1849 = vrot.slane %v1742, 1
        %v1850 = vsel %vm917, %v1848, %v1849
        %v1851 = vrot.slane %v1741, 1
        %v1852 = vrot.slane %v1743, 1
        %v1853 = vsel %vm917, %v1851, %v1852
        %v1854 = vrot.slane %v1744, 1
        %v1855 = vsel %vm917, %v1849, %v1854
        %v1856 = vrot.slane %v1745, 1
        %v1857 = vsel %vm917, %v1852, %v1856
        %v1858 = vrot.slane %v1746, 1
        %v1859 = vrot.slane %v1748, 1
        %v1860 = vsel %vm917, %v1858, %v1859
        %v1861 = vrot.slane %v1747, 1
        %v1862 = vrot.slane %v1749, 1
        %v1863 = vsel %vm917, %v1861, %v1862
        %v1864 = vrot.slane %v1750, 1
        %v1865 = vsel %vm917, %v1859, %v1864
        %v1866 = vrot.slane %v1751, 1
        %v1867 = vsel %vm917, %v1862, %v1866
        %v1868 = vrot.slane %v1752, 1
        %v1869 = vrot.slane %v1754, 1
        %v1870 = vsel %vm917, %v1868, %v1869
        %v1871 = vrot.slane %v1753, 1
        %v1872 = vrot.slane %v1755, 1
        %v1873 = vsel %vm917, %v1871, %v1872
        %v1874 = vrot.slane %v1756, 1
        %v1875 = vsel %vm917, %v1869, %v1874
        %v1876 = vrot.slane %v1757, 1
        %v1877 = vsel %vm917, %v1872, %v1876
        %v1878 = vrot.slane %v1758, 1
        %v1879 = vrot.slane %v1760, 1
        %v1880 = vsel %vm917, %v1878, %v1879
        %v1881 = vrot.slane %v1759, 1
        %v1882 = vrot.slane %v1761, 1
        %v1883 = vsel %vm917, %v1881, %v1882
        %v1884 = vrot.slane %v1762, 1
        %v1885 = vsel %vm917, %v1879, %v1884
        %v1886 = vrot.slane %v1763, 1
        %v1887 = vsel %vm917, %v1882, %v1886
        %v1888 = vrot.slane %v1764, 1
        %v1889 = vrot.slane %v1766, 1
        %v1890 = vsel %vm917, %v1888, %v1889
        %v1891 = vrot.slane %v1765, 1
        %v1892 = vrot.slane %v1767, 1
        %v1893 = vsel %vm917, %v1891, %v1892
        %v1894 = vrot.slane %v1768, 1
        %v1895 = vsel %vm917, %v1889, %v1894
        %v1896 = vrot.slane %v1769, 1
        %v1897 = vsel %vm917, %v1892, %v1896
        %v1930 = vadd.f32 %v1679, %v1820
        %v1931 = vadd.f32 %v1680, %v1823
        %v1932 = vadd.f32 %v1681, %v1825
        %v1933 = vadd.f32 %v1682, %v1827
        %v1934 = vadd.f32 %v1683, %v1830
        %v1935 = vadd.f32 %v1684, %v1833
        %v1936 = vadd.f32 %v1685, %v1835
        %v1937 = vadd.f32 %v1686, %v1837
        %v1938 = vadd.f32 %v1687, %v1840
        %v1939 = vadd.f32 %v1688, %v1843
        %v1940 = vadd.f32 %v1689, %v1845
        %v1941 = vadd.f32 %v1690, %v1847
        %v1942 = vadd.f32 %v1691, %v1850
        %v1943 = vadd.f32 %v1692, %v1853
        %v1944 = vadd.f32 %v1693, %v1855
        %v1945 = vadd.f32 %v1694, %v1857
        %v1946 = vadd.f32 %v1695, %v1860
        %v1947 = vadd.f32 %v1696, %v1863
        %v1948 = vadd.f32 %v1697, %v1865
        %v1949 = vadd.f32 %v1698, %v1867
        %v1950 = vadd.f32 %v1699, %v1870
        %v1951 = vadd.f32 %v1700, %v1873
        %v1952 = vadd.f32 %v1701, %v1875
        %v1953 = vadd.f32 %v1702, %v1877
        %v1954 = vadd.f32 %v1703, %v1880
        %v1955 = vadd.f32 %v1704, %v1883
        %v1956 = vadd.f32 %v1705, %v1885
        %v1957 = vadd.f32 %v1706, %v1887
        %v1958 = vadd.f32 %v1707, %v1890
        %v1959 = vadd.f32 %v1708, %v1893
        %v1960 = vadd.f32 %v1709, %v1895
        %v1961 = vadd.f32 %v1710, %v1897
        %1962 = vst [vmem:[%s462] sm:$0xff] %v1930
        %vm1963 = vcmask 523264
        %1964 = vst.msk [vmem:[%s462 + $0x8] sm:$0xff] %vm1963, %v1931
        %1965 = vst [vmem:[%s462 + $0x10] sm:$0xff] %v1932
        %1966 = vst.msk [vmem:[%s462 + $0x18] sm:$0xff] %vm1963, %v1933
        %1967 = vst [vmem:[%s462 + $0x20] sm:$0xff] %v1934
        %1968 = vst.msk [vmem:[%s462 + $0x28] sm:$0xff] %vm1963, %v1935
        %1969 = vst [vmem:[%s462 + $0x30] sm:$0xff] %v1936
        %1970 = vst.msk [vmem:[%s462 + $0x38] sm:$0xff] %vm1963, %v1937
        %1971 = vst [vmem:[%s462 + $0x40] sm:$0xff] %v1938
        %1972 = vst.msk [vmem:[%s462 + $0x48] sm:$0xff] %vm1963, %v1939
        %1973 = vst [vmem:[%s462 + $0x50] sm:$0xff] %v1940
        %1974 = vst.msk [vmem:[%s462 + $0x58] sm:$0xff] %vm1963, %v1941
        %1975 = vst [vmem:[%s462 + $0x60] sm:$0xff] %v1942
        %1976 = vst.msk [vmem:[%s462 + $0x68] sm:$0xff] %vm1963, %v1943
        %1977 = vst [vmem:[%s462 + $0x70] sm:$0xff] %v1944
        %1978 = vst.msk [vmem:[%s462 + $0x78] sm:$0xff] %vm1963, %v1945
        %1979 = vst [vmem:[%s462 + $0x80] sm:$0xff] %v1946
        %1980 = vst.msk [vmem:[%s462 + $0x88] sm:$0xff] %vm1963, %v1947
        %1981 = vst [vmem:[%s462 + $0x90] sm:$0xff] %v1948
        %1982 = vst.msk [vmem:[%s462 + $0x98] sm:$0xff] %vm1963, %v1949
        %1983 = vst [vmem:[%s462 + $0xa0] sm:$0xff] %v1950
        %1984 = vst.msk [vmem:[%s462 + $0xa8] sm:$0xff] %vm1963, %v1951
        %1985 = vst [vmem:[%s462 + $0xb0] sm:$0xff] %v1952
        %1986 = vst.msk [vmem:[%s462 + $0xb8] sm:$0xff] %vm1963, %v1953
        %1987 = vst [vmem:[%s462 + $0xc0] sm:$0xff] %v1954
        %1988 = vst.msk [vmem:[%s462 + $0xc8] sm:$0xff] %vm1963, %v1955
        %1989 = vst [vmem:[%s462 + $0xd0] sm:$0xff] %v1956
        %1990 = vst.msk [vmem:[%s462 + $0xd8] sm:$0xff] %vm1963, %v1957
        %1991 = vst [vmem:[%s462 + $0xe0] sm:$0xff] %v1958
        %1992 = vst.msk [vmem:[%s462 + $0xe8] sm:$0xff] %vm1963, %v1959
        %1993 = vst [vmem:[%s462 + $0xf0] sm:$0xff] %v1960
        %1994 = vst.msk [vmem:[%s462 + $0xf8] sm:$0xff] %vm1963, %v1961
        %s1995 = sand.u32 %s120, 1
        %s1996 = scalar_lea.sflag [#allocation5], %s1995
        %s1997 = sand.u32 %s120, 1
        %s1998 = smul.addr %s1997, 256
        %s1999 = scalar_lea.vmem [#allocation4], %s1998
        // Predicated region
        $region86: #{depthwise_conv3x3_s2.1} parent=76 // pred_check
          %p2000 = pneg %p130
        $region87: #{depthwise_conv3x3_s2.1} parent=76 // pred_check_branch
          %2002 = sbr.rel (%p2000) target = $region89
        $region88: #{depthwise_conv3x3_s2.1} parent=76 // pred_region
          %s2003 = smul.u32 8, %s22
          %s2005 = ssub.s32 4096, 4096
          %2006 = vsyncadd %s1996, %s2005
          %s2007 = smul.addr %s2003, 4
          %s2008 = smul.addr %s21, 64
          %s2009 = sadd.s32 %s2007, %s2008
          %s2010 = smul.addr %s2009, 128
          %s2011 = scalar_lea.hbm %s3, %s2010
          %s2012 = sshll.u32 %s1999, 4
          %s2013 = int_to_ptr.vmem [resolvable:$true] %s2012
          %2018 = dma.vmem_to_hbm [thread:$0]  %s2013, 4096, %s2011, %s1996, 256, 256, 16
        $region89: #{depthwise_conv3x3_s2.1} parent=76 // pred_fallthru
          _
      $region77: #{depthwise_conv3x3_s2.1} parent=5 // pred_fallthru
        _
      %p2019 = scmp.le.s32.totalorder 2, %s12
      // Predicated region
      $region90: #{depthwise_conv3x3_s2.1} parent=5 // pred_check
        %p2020 = pneg %p2019
      $region91: #{depthwise_conv3x3_s2.1} parent=5 // pred_check_branch
        %2022 = sbr.rel (%p2020) target = $region93
      $region92: #{depthwise_conv3x3_s2.1} parent=5 // pred_region
        %s2023 = ssub.s32 %s12, 2
        // Predicated region
        $region94: #{depthwise_conv3x3_s2.1} parent=92 // pred_check
          %p2024 = pneg %p136
        $region95: #{depthwise_conv3x3_s2.1} parent=92 // pred_check_branch
          %2026 = sbr.rel (%p2024) target = $region97
        $region96: #{depthwise_conv3x3_s2.1} parent=92 // pred_region
          %s2027 = sand.u32 %s121, 1
          %s2028 = scalar_lea.sflag [#allocation5], %s2027
          %s2029 = sand.u32 %s121, 1
          %s2030 = smul.addr %s2029, 256
          %s2031 = scalar_lea.vmem [#allocation4], %s2030
          %2032 = dma.done %s2028, 4096
        $region97: #{depthwise_conv3x3_s2.1} parent=92 // pred_fallthru
          _
      $region93: #{depthwise_conv3x3_s2.1} parent=5 // pred_fallthru
        _
    $region6: #{depthwise_conv3x3_s2.1} parent=1 // loop_footer
      %s16 = sadd.s32 1, %s12
    $region7: #{depthwise_conv3x3_s2.1} parent=1 // loop_footer_branch
      %11 = sbr.rel target = $region3
    $region8: #{depthwise_conv3x3_s2.1} parent=1 // loop_exit
      _
    %2033 = vsyncpa [#allocation5], 1
    %s2034 = scalar_lea.sflag [#allocation5], 1
    %2035 = vsyncpa %s2034, 1

</llo_original>
